<compile_context>
chip_gen: v7x
topology: tpu7x:2x2x1
jax: 0.10.0
libtpu: 0.0.40
codegen_flags: <defaults>
</compile_context>

<pallas_src>
import jax
import jax.numpy as jnp
from jax.experimental import pallas as pl
from jax.experimental.pallas import tpu as pltpu

# ---------------- model hyper-parameters (small, deterministic) -------------
C_DIM = 16      # latent code dimension
DIM = 3         # input point dimension
DP = 8          # input dimension padded to sublane multiple
H = 32          # hidden dimension
B = 2           # batch
T = 8           # points per cloud


# ---------------- static packing layout --------------------------------------
def _build_w_layout():
    """Weight slab layout: name -> (row_offset, rows, cols). All row counts are
    multiples of 8 so every slice starts on a sublane boundary."""
    entries = [("fc_pos", DP, 2 * H),
               ("b0_fc0", 2 * H, H),
               ("b0_fc1", H, H),
               ("b0_sc", 2 * H, H)]
    for k in range(1, 5):
        entries += [(f"b{k}_fc0a", H, H), (f"b{k}_fc0b", H, H),
                    (f"b{k}_fc1", H, H),
                    (f"b{k}_sca", H, H), (f"b{k}_scb", H, H)]
    entries.append(("fc_c", H, C_DIM))
    layout, off = {}, 0
    for name, rows, cols in entries:
        layout[name] = (off, rows, cols)
        off += rows
    return layout, off


W_LAYOUT, W_ROWS = _build_w_layout()           # W_ROWS == 840 (multiple of 8)

_BIAS_SPECS = ([("fc_pos", 2 * H), ("b0_fc0", H), ("b0_fc1", H)]
               + [(f"b{k}_{p}", H) for k in range(1, 5) for p in ("fc0", "fc1")]
               + [("fc_c", C_DIM)])
B_LAYOUT = {name: (i, cols) for i, (name, cols) in enumerate(_BIAS_SPECS)}
B_ROWS = 16                                     # 12 bias rows, padded to 16


# ---------------- kernel ------------------------------------------------------
def _make_kernel(b, t):
    n = b * t

    def kernel(x_ref, w_ref, bias_ref, o_ref):
        relu = lambda v: jnp.maximum(v, 0.0)
        mm = lambda a, wm: jnp.dot(a, wm, preferred_element_type=jnp.float32)

        def w(name):
            off, rows, cols = W_LAYOUT[name]
            return w_ref[off:off + rows, :cols]          # static, aligned slice

        def bias(name):
            row, cols = B_LAYOUT[name]
            return bias_ref[row:row + 1, :cols]          # (1, cols), broadcasts

        def pool(net):                                   # per-cloud max over T
            return jnp.max(net.reshape(b, t, net.shape[-1]), axis=1)   # (b, H)

        def unpool(rows_):                               # (b, H) -> (b*t, H)
            hh = rows_.shape[-1]
            return jnp.broadcast_to(rows_[:, None, :], (b, t, hh)).reshape(n, hh)

        x = x_ref[...]                                   # (n, DP)

        # fc_pos
        net = mm(x, w("fc_pos")) + bias("fc_pos")        # (n, 2H)

        # block_0: ResnetBlockFC(2H -> H) on the raw fc_pos features
        h = mm(relu(net), w("b0_fc0")) + bias("b0_fc0")
        dx = mm(relu(h), w("b0_fc1")) + bias("b0_fc1")
        net = mm(net, w("b0_sc")) + dx                   # (n, H)

        # blocks 1..4: input is cat([net, pooled]); expressed via split weights,
        # pooled branch batched over all clouds in one (b, H) matmul.
        for k in range(1, 5):
            p_b = pool(net)                              # (b, H)
            h = (mm(relu(net), w(f"b{k}_fc0a"))
                 + unpool(mm(relu(p_b), w(f"b{k}_fc0b")))
                 + bias(f"b{k}_fc0"))
            dx = mm(relu(h), w(f"b{k}_fc1")) + bias(f"b{k}_fc1")
            net = (mm(net, w(f"b{k}_sca"))
                   + unpool(mm(p_b, w(f"b{k}_scb")))
                   + dx)                                 # (n, H)

        # final global max-pool over points, then c = fc_c(relu(net))
        p_b = pool(net)                                  # (b, H)
        o_ref[...] = mm(relu(p_b), w("fc_c")) + bias("fc_c")    # (b, C_DIM)

    return kernel


# ---------------- wrapper -----------------------------------------------------
def _pack_params(params):
    """Pack all weights/biases into two contiguous f32 slabs."""
    w_slab = jnp.zeros((W_ROWS, 2 * H), jnp.float32)
    b_slab = jnp.zeros((B_ROWS, 2 * H), jnp.float32)

    def put_w(slab, name, wm):
        off, rows, cols = W_LAYOUT[name]
        if wm.shape[0] < rows:   # pad rows (fc_pos: 3 -> 8) with zeros
            wm = jnp.concatenate(
                [wm, jnp.zeros((rows - wm.shape[0], wm.shape[1]), wm.dtype)], axis=0)
        return slab.at[off:off + rows, :cols].set(wm)

    def put_b(slab, name, bv):
        row, cols = B_LAYOUT[name]
        return slab.at[row, :cols].set(bv)

    wpos, bpos = params["fc_pos"]
    w_slab = put_w(w_slab, "fc_pos", wpos)
    b_slab = put_b(b_slab, "fc_pos", bpos)

    w0, b0, w1, b1, ws = params["block_0"]
    w_slab = put_w(w_slab, "b0_fc0", w0)
    w_slab = put_w(w_slab, "b0_fc1", w1)
    w_slab = put_w(w_slab, "b0_sc", ws)
    b_slab = put_b(b_slab, "b0_fc0", b0)
    b_slab = put_b(b_slab, "b0_fc1", b1)

    for k in range(1, 5):
        w0, b0, w1, b1, ws = params[f"block_{k}"]
        w_slab = put_w(w_slab, f"b{k}_fc0a", w0[:H])     # acts on net
        w_slab = put_w(w_slab, f"b{k}_fc0b", w0[H:])     # acts on pooled
        w_slab = put_w(w_slab, f"b{k}_fc1", w1)
        w_slab = put_w(w_slab, f"b{k}_sca", ws[:H])
        w_slab = put_w(w_slab, f"b{k}_scb", ws[H:])
        b_slab = put_b(b_slab, f"b{k}_fc0", b0)
        b_slab = put_b(b_slab, f"b{k}_fc1", b1)

    wc, bc = params["fc_c"]
    w_slab = put_w(w_slab, "fc_c", wc)
    b_slab = put_b(b_slab, "fc_c", bc)
    return w_slab, b_slab


def resnet_pointnet_pallas(p, params):
    """p: (B, T, D) float32.  Returns (B, c_dim) float32."""
    b, t, d = p.shape
    n = b * t
    w_slab, b_slab = _pack_params(params)

    # pad point dimension 3 -> 8 (matching zero rows in the fc_pos weight slab)
    x = jnp.concatenate([p, jnp.zeros((b, t, DP - d), p.dtype)], axis=-1)
    x = x.reshape(n, DP)

    return pl.pallas_call(
        _make_kernel(b, t),
        out_shape=jax.ShapeDtypeStruct((b, C_DIM), jnp.float32),
        grid=(1,),
        in_specs=[
            pl.BlockSpec((n, DP), lambda i: (0, 0)),
            pl.BlockSpec((W_ROWS, 2 * H), lambda i: (0, 0)),
            pl.BlockSpec((B_ROWS, 2 * H), lambda i: (0, 0)),
        ],
        out_specs=pl.BlockSpec((b, C_DIM), lambda i: (0, 0)),
        compiler_params=pltpu.CompilerParams(
            dimension_semantics=("arbitrary",)),
    )(x, w_slab, b_slab)


# ---------------- params & reference ------------------------------------------
def init_params(key):
    """Synthetic parameters. Linear weights stored (in, out); biases 1-D.
    (torch zero-inits fc_1 weights; random here for a meaningful numeric test —
    forward semantics are identical.)"""
    def linear(k, fin, fout, scale=0.1, with_bias=True):
        kw, kb = jax.random.split(k)
        wm = scale * jax.random.normal(kw, (fin, fout), jnp.float32)
        bv = scale * jax.random.normal(kb, (fout,), jnp.float32) if with_bias else None
        return wm, bv

    ks = jax.random.split(key, 17)
    params = {"fc_pos": linear(ks[0], DIM, 2 * H)}
    ki = 1
    for blk in range(5):
        w0, b0 = linear(ks[ki], 2 * H, H); ki += 1
        w1, b1 = linear(ks[ki], H, H); ki += 1
        ws, _ = linear(ks[ki], 2 * H, H, with_bias=False); ki += 1
        params[f"block_{blk}"] = (w0, b0, w1, b1, ws)
    params["fc_c"] = linear(ks[ki], H, C_DIM)
    return params


def resnet_pointnet_ref(p, params):
    """Pure-JAX reference mirroring the PyTorch forward exactly (with concats)."""
    relu = lambda v: jnp.maximum(v, 0.0)
    mm = lambda a, wm: jnp.matmul(a, wm, precision=jax.lax.Precision.HIGHEST)

    def block(x, prm):
        w0, b0, w1, b1, ws = prm
        h = mm(relu(x), w0) + b0
        dx = mm(relu(h), w1) + b1
        return mm(x, ws) + dx

    wpos, bpos = params["fc_pos"]
    net = mm(p, wpos) + bpos
    net = block(net, params["block_0"])
    for k in range(1, 5):
        pooled = jnp.max(net, axis=1, keepdims=True)
        cat = jnp.concatenate([net, jnp.broadcast_to(pooled, net.shape)], axis=-1)
        net = block(cat, params[f"block_{k}"])
    net = jnp.max(net, axis=1)
    wc, bc = params["fc_c"]
    return mm(relu(net), wc) + bc


if __name__ == "__main__":
    key = jax.random.PRNGKey(0)
    k_in, k_par = jax.random.split(key)
    p = jax.random.normal(k_in, (B, T, DIM), jnp.float32)
    params = init_params(k_par)

    out = jax.block_until_ready(resnet_pointnet_pallas(p, params))
    ref = resnet_pointnet_ref(p, params)

    assert out.shape == (B, C_DIM), out.shape
    assert jnp.allclose(out, ref, atol=1e-3, rtol=1e-3), (
        f"max abs diff {float(jnp.max(jnp.abs(out - ref)))}")
    print("KERNEL_OK")
</pallas_src>

<mosaic_0001>
module attributes {stable_mosaic.version = 11 : i64} {
  func.func @kernel(%arg0: i32, %arg1: memref<16x8xf32, #tpu.memory_space<vmem>>, %arg2: memref<840x64xf32, #tpu.memory_space<vmem>>, %arg3: memref<16x64xf32, #tpu.memory_space<vmem>>, %arg4: memref<2x16xf32, #tpu.memory_space<vmem>>) attributes {dimension_semantics = [#tpu.dimension_semantics<arbitrary>], iteration_bounds = array<i64: 1>, scalar_prefetch = 0 : i64, scratch_operands = 0 : i64, tpu.core_type = #tpu.core_type<tc>, window_params = [{pipeline_mode = #tpu.pipeline_mode<synchronous>, transform_indices = @transform_0, window_bounds = array<i64: 16, 8>}, {pipeline_mode = #tpu.pipeline_mode<synchronous>, transform_indices = @transform_1, window_bounds = array<i64: 840, 64>}, {pipeline_mode = #tpu.pipeline_mode<synchronous>, transform_indices = @transform_2, window_bounds = array<i64: 16, 64>}, {pipeline_mode = #tpu.pipeline_mode<synchronous>, transform_indices = @transform_3, window_bounds = array<i64: 2, 16>}]} {
    %c0 = arith.constant 0 : index
    %c0_0 = arith.constant 0 : index
    %0 = vector.load %arg1[%c0, %c0_0] : memref<16x8xf32, #tpu.memory_space<vmem>>, vector<16x8xf32>
    %c0_1 = arith.constant 0 : index
    %c0_2 = arith.constant 0 : index
    %1 = vector.load %arg2[%c0_1, %c0_2] : memref<840x64xf32, #tpu.memory_space<vmem>>, vector<8x64xf32>
    %cst = arith.constant dense<0.000000e+00> : vector<16x64xf32>
    %2 = tpu.matmul %0, %1, %cst {dimension_numbers = #tpu.dot_dimension_numbers<[1], [0], [0], [1], [0, 0, 1, 1], [], []>} : vector<16x8xf32>, vector<8x64xf32>, vector<16x64xf32> -> vector<16x64xf32>
    %c0_3 = arith.constant 0 : index
    %c0_4 = arith.constant 0 : index
    %3 = vector.load %arg3[%c0_3, %c0_4] : memref<16x64xf32, #tpu.memory_space<vmem>>, vector<1x64xf32>
    %4 = vector.broadcast %3 : vector<1x64xf32> to vector<16x64xf32>
    %5 = arith.addf %2, %4 : vector<16x64xf32>
    %cst_5 = arith.constant 0.000000e+00 : f32
    %6 = vector.broadcast %cst_5 : f32 to vector<16x64xf32>
    %7 = arith.maximumf %5, %6 : vector<16x64xf32>
    %c8 = arith.constant 8 : index
    %c0_6 = arith.constant 0 : index
    %8 = vector.load %arg2[%c8, %c0_6] : memref<840x64xf32, #tpu.memory_space<vmem>>, vector<64x32xf32>
    %cst_7 = arith.constant dense<0.000000e+00> : vector<16x32xf32>
    %9 = tpu.matmul %7, %8, %cst_7 {dimension_numbers = #tpu.dot_dimension_numbers<[1], [0], [0], [1], [0, 0, 1, 1], [], []>} : vector<16x64xf32>, vector<64x32xf32>, vector<16x32xf32> -> vector<16x32xf32>
    %c1 = arith.constant 1 : index
    %c0_8 = arith.constant 0 : index
    %10 = vector.load %arg3[%c1, %c0_8] : memref<16x64xf32, #tpu.memory_space<vmem>>, vector<1x32xf32>
    %11 = vector.broadcast %10 : vector<1x32xf32> to vector<16x32xf32>
    %12 = arith.addf %9, %11 : vector<16x32xf32>
    %cst_9 = arith.constant 0.000000e+00 : f32
    %13 = vector.broadcast %cst_9 : f32 to vector<16x32xf32>
    %14 = arith.maximumf %12, %13 : vector<16x32xf32>
    %c72 = arith.constant 72 : index
    %c0_10 = arith.constant 0 : index
    %15 = vector.load %arg2[%c72, %c0_10] : memref<840x64xf32, #tpu.memory_space<vmem>>, vector<32x32xf32>
    %cst_11 = arith.constant dense<0.000000e+00> : vector<16x32xf32>
    %16 = tpu.matmul %14, %15, %cst_11 {dimension_numbers = #tpu.dot_dimension_numbers<[1], [0], [0], [1], [0, 0, 1, 1], [], []>} : vector<16x32xf32>, vector<32x32xf32>, vector<16x32xf32> -> vector<16x32xf32>
    %c2 = arith.constant 2 : index
    %c0_12 = arith.constant 0 : index
    %17 = vector.load %arg3[%c2, %c0_12] : memref<16x64xf32, #tpu.memory_space<vmem>>, vector<1x32xf32>
    %18 = vector.broadcast %17 : vector<1x32xf32> to vector<16x32xf32>
    %19 = arith.addf %16, %18 : vector<16x32xf32>
    %c104 = arith.constant 104 : index
    %c0_13 = arith.constant 0 : index
    %20 = vector.load %arg2[%c104, %c0_13] : memref<840x64xf32, #tpu.memory_space<vmem>>, vector<64x32xf32>
    %cst_14 = arith.constant dense<0.000000e+00> : vector<16x32xf32>
    %21 = tpu.matmul %5, %20, %cst_14 {dimension_numbers = #tpu.dot_dimension_numbers<[1], [0], [0], [1], [0, 0, 1, 1], [], []>} : vector<16x64xf32>, vector<64x32xf32>, vector<16x32xf32> -> vector<16x32xf32>
    %22 = arith.addf %21, %19 : vector<16x32xf32>
    %23 = vector.shape_cast %22 : vector<16x32xf32> to vector<2x8x32xf32>
    %cst_15 = arith.constant dense<0xFF800000> : vector<2x32xf32>
    %24 = vector.multi_reduction <maximumf>, %23, %cst_15 [1] : vector<2x8x32xf32> to vector<2x32xf32>
    %cst_16 = arith.constant 0.000000e+00 : f32
    %25 = vector.broadcast %cst_16 : f32 to vector<16x32xf32>
    %26 = arith.maximumf %22, %25 : vector<16x32xf32>
    %c168 = arith.constant 168 : index
    %c0_17 = arith.constant 0 : index
    %27 = vector.load %arg2[%c168, %c0_17] : memref<840x64xf32, #tpu.memory_space<vmem>>, vector<32x32xf32>
    %cst_18 = arith.constant dense<0.000000e+00> : vector<16x32xf32>
    %28 = tpu.matmul %26, %27, %cst_18 {dimension_numbers = #tpu.dot_dimension_numbers<[1], [0], [0], [1], [0, 0, 1, 1], [], []>} : vector<16x32xf32>, vector<32x32xf32>, vector<16x32xf32> -> vector<16x32xf32>
    %cst_19 = arith.constant 0.000000e+00 : f32
    %29 = vector.broadcast %cst_19 : f32 to vector<2x32xf32>
    %30 = arith.maximumf %24, %29 : vector<2x32xf32>
    %c200 = arith.constant 200 : index
    %c0_20 = arith.constant 0 : index
    %31 = vector.load %arg2[%c200, %c0_20] : memref<840x64xf32, #tpu.memory_space<vmem>>, vector<32x32xf32>
    %cst_21 = arith.constant dense<0.000000e+00> : vector<2x32xf32>
    %32 = tpu.matmul %30, %31, %cst_21 {dimension_numbers = #tpu.dot_dimension_numbers<[1], [0], [0], [1], [0, 0, 1, 1], [], []>} : vector<2x32xf32>, vector<32x32xf32>, vector<2x32xf32> -> vector<2x32xf32>
    %33 = vector.shape_cast %32 : vector<2x32xf32> to vector<2x1x32xf32>
    %34 = vector.shape_cast %33 : vector<2x1x32xf32> to vector<2x1x32xf32>
    %35 = vector.broadcast %34 : vector<2x1x32xf32> to vector<2x8x32xf32>
    %36 = vector.shape_cast %35 : vector<2x8x32xf32> to vector<16x32xf32>
    %37 = arith.addf %28, %36 : vector<16x32xf32>
    %c3 = arith.constant 3 : index
    %c0_22 = arith.constant 0 : index
    %38 = vector.load %arg3[%c3, %c0_22] : memref<16x64xf32, #tpu.memory_space<vmem>>, vector<1x32xf32>
    %39 = vector.broadcast %38 : vector<1x32xf32> to vector<16x32xf32>
    %40 = arith.addf %37, %39 : vector<16x32xf32>
    %cst_23 = arith.constant 0.000000e+00 : f32
    %41 = vector.broadcast %cst_23 : f32 to vector<16x32xf32>
    %42 = arith.maximumf %40, %41 : vector<16x32xf32>
    %c232 = arith.constant 232 : index
    %c0_24 = arith.constant 0 : index
    %43 = vector.load %arg2[%c232, %c0_24] : memref<840x64xf32, #tpu.memory_space<vmem>>, vector<32x32xf32>
    %cst_25 = arith.constant dense<0.000000e+00> : vector<16x32xf32>
    %44 = tpu.matmul %42, %43, %cst_25 {dimension_numbers = #tpu.dot_dimension_numbers<[1], [0], [0], [1], [0, 0, 1, 1], [], []>} : vector<16x32xf32>, vector<32x32xf32>, vector<16x32xf32> -> vector<16x32xf32>
    %c4 = arith.constant 4 : index
    %c0_26 = arith.constant 0 : index
    %45 = vector.load %arg3[%c4, %c0_26] : memref<16x64xf32, #tpu.memory_space<vmem>>, vector<1x32xf32>
    %46 = vector.broadcast %45 : vector<1x32xf32> to vector<16x32xf32>
    %47 = arith.addf %44, %46 : vector<16x32xf32>
    %c264 = arith.constant 264 : index
    %c0_27 = arith.constant 0 : index
    %48 = vector.load %arg2[%c264, %c0_27] : memref<840x64xf32, #tpu.memory_space<vmem>>, vector<32x32xf32>
    %cst_28 = arith.constant dense<0.000000e+00> : vector<16x32xf32>
    %49 = tpu.matmul %22, %48, %cst_28 {dimension_numbers = #tpu.dot_dimension_numbers<[1], [0], [0], [1], [0, 0, 1, 1], [], []>} : vector<16x32xf32>, vector<32x32xf32>, vector<16x32xf32> -> vector<16x32xf32>
    %c296 = arith.constant 296 : index
    %c0_29 = arith.constant 0 : index
    %50 = vector.load %arg2[%c296, %c0_29] : memref<840x64xf32, #tpu.memory_space<vmem>>, vector<32x32xf32>
    %cst_30 = arith.constant dense<0.000000e+00> : vector<2x32xf32>
    %51 = tpu.matmul %24, %50, %cst_30 {dimension_numbers = #tpu.dot_dimension_numbers<[1], [0], [0], [1], [0, 0, 1, 1], [], []>} : vector<2x32xf32>, vector<32x32xf32>, vector<2x32xf32> -> vector<2x32xf32>
    %52 = vector.shape_cast %51 : vector<2x32xf32> to vector<2x1x32xf32>
    %53 = vector.shape_cast %52 : vector<2x1x32xf32> to vector<2x1x32xf32>
    %54 = vector.broadcast %53 : vector<2x1x32xf32> to vector<2x8x32xf32>
    %55 = vector.shape_cast %54 : vector<2x8x32xf32> to vector<16x32xf32>
    %56 = arith.addf %49, %55 : vector<16x32xf32>
    %57 = arith.addf %56, %47 : vector<16x32xf32>
    %58 = vector.shape_cast %57 : vector<16x32xf32> to vector<2x8x32xf32>
    %cst_31 = arith.constant dense<0xFF800000> : vector<2x32xf32>
    %59 = vector.multi_reduction <maximumf>, %58, %cst_31 [1] : vector<2x8x32xf32> to vector<2x32xf32>
    %cst_32 = arith.constant 0.000000e+00 : f32
    %60 = vector.broadcast %cst_32 : f32 to vector<16x32xf32>
    %61 = arith.maximumf %57, %60 : vector<16x32xf32>
    %c328 = arith.constant 328 : index
    %c0_33 = arith.constant 0 : index
    %62 = vector.load %arg2[%c328, %c0_33] : memref<840x64xf32, #tpu.memory_space<vmem>>, vector<32x32xf32>
    %cst_34 = arith.constant dense<0.000000e+00> : vector<16x32xf32>
    %63 = tpu.matmul %61, %62, %cst_34 {dimension_numbers = #tpu.dot_dimension_numbers<[1], [0], [0], [1], [0, 0, 1, 1], [], []>} : vector<16x32xf32>, vector<32x32xf32>, vector<16x32xf32> -> vector<16x32xf32>
    %cst_35 = arith.constant 0.000000e+00 : f32
    %64 = vector.broadcast %cst_35 : f32 to vector<2x32xf32>
    %65 = arith.maximumf %59, %64 : vector<2x32xf32>
    %c360 = arith.constant 360 : index
    %c0_36 = arith.constant 0 : index
    %66 = vector.load %arg2[%c360, %c0_36] : memref<840x64xf32, #tpu.memory_space<vmem>>, vector<32x32xf32>
    %cst_37 = arith.constant dense<0.000000e+00> : vector<2x32xf32>
    %67 = tpu.matmul %65, %66, %cst_37 {dimension_numbers = #tpu.dot_dimension_numbers<[1], [0], [0], [1], [0, 0, 1, 1], [], []>} : vector<2x32xf32>, vector<32x32xf32>, vector<2x32xf32> -> vector<2x32xf32>
    %68 = vector.shape_cast %67 : vector<2x32xf32> to vector<2x1x32xf32>
    %69 = vector.shape_cast %68 : vector<2x1x32xf32> to vector<2x1x32xf32>
    %70 = vector.broadcast %69 : vector<2x1x32xf32> to vector<2x8x32xf32>
    %71 = vector.shape_cast %70 : vector<2x8x32xf32> to vector<16x32xf32>
    %72 = arith.addf %63, %71 : vector<16x32xf32>
    %c5 = arith.constant 5 : index
    %c0_38 = arith.constant 0 : index
    %73 = vector.load %arg3[%c5, %c0_38] : memref<16x64xf32, #tpu.memory_space<vmem>>, vector<1x32xf32>
    %74 = vector.broadcast %73 : vector<1x32xf32> to vector<16x32xf32>
    %75 = arith.addf %72, %74 : vector<16x32xf32>
    %cst_39 = arith.constant 0.000000e+00 : f32
    %76 = vector.broadcast %cst_39 : f32 to vector<16x32xf32>
    %77 = arith.maximumf %75, %76 : vector<16x32xf32>
    %c392 = arith.constant 392 : index
    %c0_40 = arith.constant 0 : index
    %78 = vector.load %arg2[%c392, %c0_40] : memref<840x64xf32, #tpu.memory_space<vmem>>, vector<32x32xf32>
    %cst_41 = arith.constant dense<0.000000e+00> : vector<16x32xf32>
    %79 = tpu.matmul %77, %78, %cst_41 {dimension_numbers = #tpu.dot_dimension_numbers<[1], [0], [0], [1], [0, 0, 1, 1], [], []>} : vector<16x32xf32>, vector<32x32xf32>, vector<16x32xf32> -> vector<16x32xf32>
    %c6 = arith.constant 6 : index
    %c0_42 = arith.constant 0 : index
    %80 = vector.load %arg3[%c6, %c0_42] : memref<16x64xf32, #tpu.memory_space<vmem>>, vector<1x32xf32>
    %81 = vector.broadcast %80 : vector<1x32xf32> to vector<16x32xf32>
    %82 = arith.addf %79, %81 : vector<16x32xf32>
    %c424 = arith.constant 424 : index
    %c0_43 = arith.constant 0 : index
    %83 = vector.load %arg2[%c424, %c0_43] : memref<840x64xf32, #tpu.memory_space<vmem>>, vector<32x32xf32>
    %cst_44 = arith.constant dense<0.000000e+00> : vector<16x32xf32>
    %84 = tpu.matmul %57, %83, %cst_44 {dimension_numbers = #tpu.dot_dimension_numbers<[1], [0], [0], [1], [0, 0, 1, 1], [], []>} : vector<16x32xf32>, vector<32x32xf32>, vector<16x32xf32> -> vector<16x32xf32>
    %c456 = arith.constant 456 : index
    %c0_45 = arith.constant 0 : index
    %85 = vector.load %arg2[%c456, %c0_45] : memref<840x64xf32, #tpu.memory_space<vmem>>, vector<32x32xf32>
    %cst_46 = arith.constant dense<0.000000e+00> : vector<2x32xf32>
    %86 = tpu.matmul %59, %85, %cst_46 {dimension_numbers = #tpu.dot_dimension_numbers<[1], [0], [0], [1], [0, 0, 1, 1], [], []>} : vector<2x32xf32>, vector<32x32xf32>, vector<2x32xf32> -> vector<2x32xf32>
    %87 = vector.shape_cast %86 : vector<2x32xf32> to vector<2x1x32xf32>
    %88 = vector.shape_cast %87 : vector<2x1x32xf32> to vector<2x1x32xf32>
    %89 = vector.broadcast %88 : vector<2x1x32xf32> to vector<2x8x32xf32>
    %90 = vector.shape_cast %89 : vector<2x8x32xf32> to vector<16x32xf32>
    %91 = arith.addf %84, %90 : vector<16x32xf32>
    %92 = arith.addf %91, %82 : vector<16x32xf32>
    %93 = vector.shape_cast %92 : vector<16x32xf32> to vector<2x8x32xf32>
    %cst_47 = arith.constant dense<0xFF800000> : vector<2x32xf32>
    %94 = vector.multi_reduction <maximumf>, %93, %cst_47 [1] : vector<2x8x32xf32> to vector<2x32xf32>
    %cst_48 = arith.constant 0.000000e+00 : f32
    %95 = vector.broadcast %cst_48 : f32 to vector<16x32xf32>
    %96 = arith.maximumf %92, %95 : vector<16x32xf32>
    %c488 = arith.constant 488 : index
    %c0_49 = arith.constant 0 : index
    %97 = vector.load %arg2[%c488, %c0_49] : memref<840x64xf32, #tpu.memory_space<vmem>>, vector<32x32xf32>
    %cst_50 = arith.constant dense<0.000000e+00> : vector<16x32xf32>
    %98 = tpu.matmul %96, %97, %cst_50 {dimension_numbers = #tpu.dot_dimension_numbers<[1], [0], [0], [1], [0, 0, 1, 1], [], []>} : vector<16x32xf32>, vector<32x32xf32>, vector<16x32xf32> -> vector<16x32xf32>
    %cst_51 = arith.constant 0.000000e+00 : f32
    %99 = vector.broadcast %cst_51 : f32 to vector<2x32xf32>
    %100 = arith.maximumf %94, %99 : vector<2x32xf32>
    %c520 = arith.constant 520 : index
    %c0_52 = arith.constant 0 : index
    %101 = vector.load %arg2[%c520, %c0_52] : memref<840x64xf32, #tpu.memory_space<vmem>>, vector<32x32xf32>
    %cst_53 = arith.constant dense<0.000000e+00> : vector<2x32xf32>
    %102 = tpu.matmul %100, %101, %cst_53 {dimension_numbers = #tpu.dot_dimension_numbers<[1], [0], [0], [1], [0, 0, 1, 1], [], []>} : vector<2x32xf32>, vector<32x32xf32>, vector<2x32xf32> -> vector<2x32xf32>
    %103 = vector.shape_cast %102 : vector<2x32xf32> to vector<2x1x32xf32>
    %104 = vector.shape_cast %103 : vector<2x1x32xf32> to vector<2x1x32xf32>
    %105 = vector.broadcast %104 : vector<2x1x32xf32> to vector<2x8x32xf32>
    %106 = vector.shape_cast %105 : vector<2x8x32xf32> to vector<16x32xf32>
    %107 = arith.addf %98, %106 : vector<16x32xf32>
    %c7 = arith.constant 7 : index
    %c0_54 = arith.constant 0 : index
    %108 = vector.load %arg3[%c7, %c0_54] : memref<16x64xf32, #tpu.memory_space<vmem>>, vector<1x32xf32>
    %109 = vector.broadcast %108 : vector<1x32xf32> to vector<16x32xf32>
    %110 = arith.addf %107, %109 : vector<16x32xf32>
    %cst_55 = arith.constant 0.000000e+00 : f32
    %111 = vector.broadcast %cst_55 : f32 to vector<16x32xf32>
    %112 = arith.maximumf %110, %111 : vector<16x32xf32>
    %c552 = arith.constant 552 : index
    %c0_56 = arith.constant 0 : index
    %113 = vector.load %arg2[%c552, %c0_56] : memref<840x64xf32, #tpu.memory_space<vmem>>, vector<32x32xf32>
    %cst_57 = arith.constant dense<0.000000e+00> : vector<16x32xf32>
    %114 = tpu.matmul %112, %113, %cst_57 {dimension_numbers = #tpu.dot_dimension_numbers<[1], [0], [0], [1], [0, 0, 1, 1], [], []>} : vector<16x32xf32>, vector<32x32xf32>, vector<16x32xf32> -> vector<16x32xf32>
    %c8_58 = arith.constant 8 : index
    %c0_59 = arith.constant 0 : index
    %115 = vector.load %arg3[%c8_58, %c0_59] : memref<16x64xf32, #tpu.memory_space<vmem>>, vector<1x32xf32>
    %116 = vector.broadcast %115 : vector<1x32xf32> to vector<16x32xf32>
    %117 = arith.addf %114, %116 : vector<16x32xf32>
    %c584 = arith.constant 584 : index
    %c0_60 = arith.constant 0 : index
    %118 = vector.load %arg2[%c584, %c0_60] : memref<840x64xf32, #tpu.memory_space<vmem>>, vector<32x32xf32>
    %cst_61 = arith.constant dense<0.000000e+00> : vector<16x32xf32>
    %119 = tpu.matmul %92, %118, %cst_61 {dimension_numbers = #tpu.dot_dimension_numbers<[1], [0], [0], [1], [0, 0, 1, 1], [], []>} : vector<16x32xf32>, vector<32x32xf32>, vector<16x32xf32> -> vector<16x32xf32>
    %c616 = arith.constant 616 : index
    %c0_62 = arith.constant 0 : index
    %120 = vector.load %arg2[%c616, %c0_62] : memref<840x64xf32, #tpu.memory_space<vmem>>, vector<32x32xf32>
    %cst_63 = arith.constant dense<0.000000e+00> : vector<2x32xf32>
    %121 = tpu.matmul %94, %120, %cst_63 {dimension_numbers = #tpu.dot_dimension_numbers<[1], [0], [0], [1], [0, 0, 1, 1], [], []>} : vector<2x32xf32>, vector<32x32xf32>, vector<2x32xf32> -> vector<2x32xf32>
    %122 = vector.shape_cast %121 : vector<2x32xf32> to vector<2x1x32xf32>
    %123 = vector.shape_cast %122 : vector<2x1x32xf32> to vector<2x1x32xf32>
    %124 = vector.broadcast %123 : vector<2x1x32xf32> to vector<2x8x32xf32>
    %125 = vector.shape_cast %124 : vector<2x8x32xf32> to vector<16x32xf32>
    %126 = arith.addf %119, %125 : vector<16x32xf32>
    %127 = arith.addf %126, %117 : vector<16x32xf32>
    %128 = vector.shape_cast %127 : vector<16x32xf32> to vector<2x8x32xf32>
    %cst_64 = arith.constant dense<0xFF800000> : vector<2x32xf32>
    %129 = vector.multi_reduction <maximumf>, %128, %cst_64 [1] : vector<2x8x32xf32> to vector<2x32xf32>
    %cst_65 = arith.constant 0.000000e+00 : f32
    %130 = vector.broadcast %cst_65 : f32 to vector<16x32xf32>
    %131 = arith.maximumf %127, %130 : vector<16x32xf32>
    %c648 = arith.constant 648 : index
    %c0_66 = arith.constant 0 : index
    %132 = vector.load %arg2[%c648, %c0_66] : memref<840x64xf32, #tpu.memory_space<vmem>>, vector<32x32xf32>
    %cst_67 = arith.constant dense<0.000000e+00> : vector<16x32xf32>
    %133 = tpu.matmul %131, %132, %cst_67 {dimension_numbers = #tpu.dot_dimension_numbers<[1], [0], [0], [1], [0, 0, 1, 1], [], []>} : vector<16x32xf32>, vector<32x32xf32>, vector<16x32xf32> -> vector<16x32xf32>
    %cst_68 = arith.constant 0.000000e+00 : f32
    %134 = vector.broadcast %cst_68 : f32 to vector<2x32xf32>
    %135 = arith.maximumf %129, %134 : vector<2x32xf32>
    %c680 = arith.constant 680 : index
    %c0_69 = arith.constant 0 : index
    %136 = vector.load %arg2[%c680, %c0_69] : memref<840x64xf32, #tpu.memory_space<vmem>>, vector<32x32xf32>
    %cst_70 = arith.constant dense<0.000000e+00> : vector<2x32xf32>
    %137 = tpu.matmul %135, %136, %cst_70 {dimension_numbers = #tpu.dot_dimension_numbers<[1], [0], [0], [1], [0, 0, 1, 1], [], []>} : vector<2x32xf32>, vector<32x32xf32>, vector<2x32xf32> -> vector<2x32xf32>
    %138 = vector.shape_cast %137 : vector<2x32xf32> to vector<2x1x32xf32>
    %139 = vector.shape_cast %138 : vector<2x1x32xf32> to vector<2x1x32xf32>
    %140 = vector.broadcast %139 : vector<2x1x32xf32> to vector<2x8x32xf32>
    %141 = vector.shape_cast %140 : vector<2x8x32xf32> to vector<16x32xf32>
    %142 = arith.addf %133, %141 : vector<16x32xf32>
    %c9 = arith.constant 9 : index
    %c0_71 = arith.constant 0 : index
    %143 = vector.load %arg3[%c9, %c0_71] : memref<16x64xf32, #tpu.memory_space<vmem>>, vector<1x32xf32>
    %144 = vector.broadcast %143 : vector<1x32xf32> to vector<16x32xf32>
    %145 = arith.addf %142, %144 : vector<16x32xf32>
    %cst_72 = arith.constant 0.000000e+00 : f32
    %146 = vector.broadcast %cst_72 : f32 to vector<16x32xf32>
    %147 = arith.maximumf %145, %146 : vector<16x32xf32>
    %c712 = arith.constant 712 : index
    %c0_73 = arith.constant 0 : index
    %148 = vector.load %arg2[%c712, %c0_73] : memref<840x64xf32, #tpu.memory_space<vmem>>, vector<32x32xf32>
    %cst_74 = arith.constant dense<0.000000e+00> : vector<16x32xf32>
    %149 = tpu.matmul %147, %148, %cst_74 {dimension_numbers = #tpu.dot_dimension_numbers<[1], [0], [0], [1], [0, 0, 1, 1], [], []>} : vector<16x32xf32>, vector<32x32xf32>, vector<16x32xf32> -> vector<16x32xf32>
    %c10 = arith.constant 10 : index
    %c0_75 = arith.constant 0 : index
    %150 = vector.load %arg3[%c10, %c0_75] : memref<16x64xf32, #tpu.memory_space<vmem>>, vector<1x32xf32>
    %151 = vector.broadcast %150 : vector<1x32xf32> to vector<16x32xf32>
    %152 = arith.addf %149, %151 : vector<16x32xf32>
    %c744 = arith.constant 744 : index
    %c0_76 = arith.constant 0 : index
    %153 = vector.load %arg2[%c744, %c0_76] : memref<840x64xf32, #tpu.memory_space<vmem>>, vector<32x32xf32>
    %cst_77 = arith.constant dense<0.000000e+00> : vector<16x32xf32>
    %154 = tpu.matmul %127, %153, %cst_77 {dimension_numbers = #tpu.dot_dimension_numbers<[1], [0], [0], [1], [0, 0, 1, 1], [], []>} : vector<16x32xf32>, vector<32x32xf32>, vector<16x32xf32> -> vector<16x32xf32>
    %c776 = arith.constant 776 : index
    %c0_78 = arith.constant 0 : index
    %155 = vector.load %arg2[%c776, %c0_78] : memref<840x64xf32, #tpu.memory_space<vmem>>, vector<32x32xf32>
    %cst_79 = arith.constant dense<0.000000e+00> : vector<2x32xf32>
    %156 = tpu.matmul %129, %155, %cst_79 {dimension_numbers = #tpu.dot_dimension_numbers<[1], [0], [0], [1], [0, 0, 1, 1], [], []>} : vector<2x32xf32>, vector<32x32xf32>, vector<2x32xf32> -> vector<2x32xf32>
    %157 = vector.shape_cast %156 : vector<2x32xf32> to vector<2x1x32xf32>
    %158 = vector.shape_cast %157 : vector<2x1x32xf32> to vector<2x1x32xf32>
    %159 = vector.broadcast %158 : vector<2x1x32xf32> to vector<2x8x32xf32>
    %160 = vector.shape_cast %159 : vector<2x8x32xf32> to vector<16x32xf32>
    %161 = arith.addf %154, %160 : vector<16x32xf32>
    %162 = arith.addf %161, %152 : vector<16x32xf32>
    %163 = vector.shape_cast %162 : vector<16x32xf32> to vector<2x8x32xf32>
    %cst_80 = arith.constant dense<0xFF800000> : vector<2x32xf32>
    %164 = vector.multi_reduction <maximumf>, %163, %cst_80 [1] : vector<2x8x32xf32> to vector<2x32xf32>
    %cst_81 = arith.constant 0.000000e+00 : f32
    %165 = vector.broadcast %cst_81 : f32 to vector<2x32xf32>
    %166 = arith.maximumf %164, %165 : vector<2x32xf32>
    %c808 = arith.constant 808 : index
    %c0_82 = arith.constant 0 : index
    %167 = vector.load %arg2[%c808, %c0_82] : memref<840x64xf32, #tpu.memory_space<vmem>>, vector<32x16xf32>
    %cst_83 = arith.constant dense<0.000000e+00> : vector<2x16xf32>
    %168 = tpu.matmul %166, %167, %cst_83 {dimension_numbers = #tpu.dot_dimension_numbers<[1], [0], [0], [1], [0, 0, 1, 1], [], []>} : vector<2x32xf32>, vector<32x16xf32>, vector<2x16xf32> -> vector<2x16xf32>
    %c11 = arith.constant 11 : index
    %c0_84 = arith.constant 0 : index
    %169 = vector.load %arg3[%c11, %c0_84] : memref<16x64xf32, #tpu.memory_space<vmem>>, vector<1x16xf32>
    %170 = vector.broadcast %169 : vector<1x16xf32> to vector<2x16xf32>
    %171 = arith.addf %168, %170 : vector<2x16xf32>
    %c0_85 = arith.constant 0 : index
    %c0_86 = arith.constant 0 : index
    %172 = vector.load %arg4[%c0_85, %c0_86] : memref<2x16xf32, #tpu.memory_space<vmem>>, vector<2x16xf32>
    tpu.vector_store %arg4[%c0_85, %c0_86], %171 {strides = array<i32>} : memref<2x16xf32, #tpu.memory_space<vmem>>, vector<2x16xf32>,
    return
  }
  func.func @transform_0(%arg0: i32) -> (i32, i32) {
    %c0_i32 = arith.constant 0 : i32
    %c0_i32_0 = arith.constant 0 : i32
    %c0_i32_1 = arith.constant 0 : i32
    return %c0_i32, %c0_i32_0 : i32, i32
  }
  func.func @transform_1(%arg0: i32) -> (i32, i32) {
    %c0_i32 = arith.constant 0 : i32
    %c0_i32_0 = arith.constant 0 : i32
    %c0_i32_1 = arith.constant 0 : i32
    return %c0_i32, %c0_i32_0 : i32, i32
  }
  func.func @transform_2(%arg0: i32) -> (i32, i32) {
    %c0_i32 = arith.constant 0 : i32
    %c0_i32_0 = arith.constant 0 : i32
    %c0_i32_1 = arith.constant 0 : i32
    return %c0_i32, %c0_i32_0 : i32, i32
  }
  func.func @transform_3(%arg0: i32) -> (i32, i32) {
    %c0_i32 = arith.constant 0 : i32
    %c0_i32_0 = arith.constant 0 : i32
    %c0_i32_1 = arith.constant 0 : i32
    return %c0_i32, %c0_i32_0 : i32, i32
  }
}

</mosaic_0001>

<llo_original>
// kernel: tpu_custom_call.1
$region0: #{tpu_custom_call.1}
  #allocation0 [shape = 'u32[]', space=smem, size = 0x4, offset = 0x4, fixed_abs, tag = 'smem constant byte address 0x4 - core index']
  #allocation1 [shape = 'u32[144,128]{1,0:T(1,128)}', space=vmem, size = 0x12000, scoped, tag = 'internal scratch']
  %s0 = inlined_call_operand.vmem [shape: f32[16,8], index: 0, kind: input, shape index: {}]
  %s1 = inlined_call_operand.vmem [shape: f32[840,64], index: 1, kind: input, shape index: {}]
  %s2 = inlined_call_operand.vmem [shape: f32[16,64], index: 2, kind: input, shape index: {}]
  %s3 = inlined_call_operand.hbm [shape: f32[2,16], index: 3, kind: output, shape index: {}]
  %s4 = sld [smem:[#allocation0]]
  $region22: #{tpu_custom_call.1} parent=0
    _
  %s6 = ssub.s32 1, %s4
  %s7 = scalar_select 0, %s6, %s4
  $region1: #{tpu_custom_call.1} parent=0
    #allocation2 [shape = 'u8[1024]{0}', space=vmem, size = 0x400, scoped, tag = 'output window, operand 0, single buffered']
    #allocation3 [shape = 's32[1]{0}', space=sflag, size = 0x4, scoped, tag = 'scoped memory for tpu_custom_call.1']
    %8 = vsyncpa [#allocation3], 0
    // Predicated region
    $region2: #{tpu_custom_call.1} parent=1 // pred_check
      _
    $region3: #{tpu_custom_call.1} parent=1 // pred_check_branch
      %10 = sbr.rel (0) target = $region5
    $region4: #{tpu_custom_call.1} parent=1 // pred_region
      _
    $region5: #{tpu_custom_call.1} parent=1 // pred_fallthru
      _
    // Predicated region
    $region6: #{tpu_custom_call.1} parent=1 // pred_check
      _
    $region7: #{tpu_custom_call.1} parent=1 // pred_check_branch
      %12 = sbr.rel (0) target = $region9
    $region8: #{tpu_custom_call.1} parent=1 // pred_region
      _
    $region9: #{tpu_custom_call.1} parent=1 // pred_fallthru
      _
    // Predicated region
    $region10: #{tpu_custom_call.1} parent=1 // pred_check
      _
    $region11: #{tpu_custom_call.1} parent=1 // pred_check_branch
      %14 = sbr.rel (0) target = $region13
    $region12: #{tpu_custom_call.1} parent=1 // pred_region
      _
    $region13: #{tpu_custom_call.1} parent=1 // pred_fallthru
      _
    %v15 = vld [vmem:[%s0] sm:$0xff]
    %v16 = vld [vmem:[%s0 + $0x8] sm:$0xff]
    %v17 = vld [vmem:[%s1] sm:$0xff]
    %v18 = vld [vmem:[%s2] sm:$0x1]
    %v19 = vlaneseq
    %v20 = vshrl.u32 %v19, 7
    %v21 = vsub.s32 0, %v20
    %v22 = vrot.slane %v18, %v21
    %vm23 = vcmask 64512
    %v25 = vsel %vm23, %v15, 0
    %v28 = vsel %vm23, %v16, 0
    %30 = vmatprep.subr.mxu0 0.0
    %31 = vmatpush1.msra.mxu0 %v17
    %32 = vmatprep.subr.mxu0 0.0
    %33 = vmatpush1.msra.mxu0 0.0
    %34 = vmatprep.subr.mxu0 0.0
    %35 = vmatpush1.msra.mxu0 0.0
    %36 = vmatprep.subr.mxu0 0.0
    %37 = vmatpush1.msra.mxu0 0.0
    %38 = vmatprep.subr.mxu0 0.0
    %39 = vmatpush1.msra.mxu0 0.0
    %40 = vmatprep.subr.mxu0 0.0
    %41 = vmatpush1.msra.mxu0 0.0
    %42 = vmatprep.subr.mxu0 0.0
    %43 = vmatpush1.msra.mxu0 0.0
    %44 = vmatprep.subr.mxu0 0.0
    %45 = vmatpush1.msra.mxu0 0.0
    %46 = vmatprep.subr.mxu0 0.0
    %47 = vmatpush1.msra.mxu0 0.0
    %48 = vmatprep.subr.mxu0 0.0
    %49 = vmatpush1.msra.mxu0 0.0
    %50 = vmatprep.subr.mxu0 0.0
    %51 = vmatpush1.msra.mxu0 0.0
    %52 = vmatprep.subr.mxu0 0.0
    %53 = vmatpush1.msra.mxu0 0.0
    %54 = vmatprep.subr.mxu0 0.0
    %55 = vmatpush1.msra.mxu0 0.0
    %56 = vmatprep.subr.mxu0 0.0
    %57 = vmatpush1.msra.mxu0 0.0
    %58 = vmatprep.subr.mxu0 0.0
    %59 = vmatpush1.msra.mxu0 0.0
    %60 = vmatprep.subr.mxu0 0.0
    %61 = vmatpush1.msra.mxu0 0.0
    %62 = vmatprep.subr.mxu0 0.0
    %63 = vmatpush1.msra.mxu0 0.0
    %64 = vmatprep.subr.mxu0 0.0
    %65 = vmatpush1.msra.mxu0 0.0
    %66 = vmatprep.subr.mxu0 0.0
    %67 = vmatpush1.msra.mxu0 0.0
    %68 = vmatprep.subr.mxu0 0.0
    %69 = vmatpush1.msra.mxu0 0.0
    %70 = vmatprep.subr.mxu0 0.0
    %71 = vmatpush1.msra.mxu0 0.0
    %72 = vmatprep.subr.mxu0 0.0
    %73 = vmatpush1.msra.mxu0 0.0
    %74 = vmatprep.subr.mxu0 0.0
    %75 = vmatpush1.msra.mxu0 0.0
    %76 = vmatprep.subr.mxu0 0.0
    %77 = vmatpush1.msra.mxu0 0.0
    %78 = vmatprep.subr.mxu0 0.0
    %79 = vmatpush1.msra.mxu0 0.0
    %80 = vmatprep.subr.mxu0 0.0
    %81 = vmatpush1.msra.mxu0 0.0
    %82 = vmatprep.subr.mxu0 0.0
    %83 = vmatpush1.msra.mxu0 0.0
    %84 = vmatprep.subr.mxu0 0.0
    %85 = vmatpush1.msra.mxu0 0.0
    %86 = vmatprep.subr.mxu0 0.0
    %87 = vmatpush1.msra.mxu0 0.0
    %88 = vmatprep.subr.mxu0 0.0
    %89 = vmatpush1.msra.mxu0 0.0
    %90 = vmatprep.subr.mxu0 0.0
    %91 = vmatpush1.msra.mxu0 0.0
    %92 = vmatprep.subr.mxu0 0.0
    %93 = vmatpush1.msra.mxu0 0.0
    %94 = vmatprep.mubr.f32.mxu0 0.0
    %95 = vmatmul.mubr.f32.gmra.mrb[0].mxu0 %v25
    %v96 = vpop.f32.mrb[0].mxu0
    %v97 = vadd.f32 %v22, %v96
    %v98 = vpop.f32.mrb[0].mxu0
    %99 = vmatprep.mubr.f32.mxu0 0.0
    %100 = vmatmul.mubr.f32.gmra.mrb[0].mxu0 %v28
    %v101 = vpop.f32.mrb[0].mxu0
    %v102 = vadd.f32 %v22, %v101
    %v103 = vpop.f32.mrb[0].mxu0
    %104 = vdwg.mxu0
    %v105 = vmax.f32 %v97, 0.0
    %v106 = vmax.f32 %v102, 0.0
    %v107 = vld [vmem:[%s1 + $0x8] sm:$0xff]
    %v108 = vld [vmem:[%s1 + $0x10] sm:$0xff]
    %v109 = vld [vmem:[%s1 + $0x18] sm:$0xff]
    %v110 = vld [vmem:[%s1 + $0x20] sm:$0xff]
    %v111 = vld [vmem:[%s1 + $0x28] sm:$0xff]
    %v112 = vld [vmem:[%s1 + $0x30] sm:$0xff]
    %v113 = vld [vmem:[%s1 + $0x38] sm:$0xff]
    %v114 = vld [vmem:[%s1 + $0x40] sm:$0xff]
    %v115 = vld [vmem:[%s2 + $0x1] sm:$0x1]
    %v116 = vlaneseq
    %v117 = vshrl.u32 %v116, 7
    %v118 = vsub.s32 0, %v117
    %v119 = vrot.slane %v115, %v118
    %vm120 = vcmask 523264
    %v122 = vsel %vm120, %v105, 0
    %v125 = vsel %vm120, %v106, 0
    %127 = vmatprep.subr.mxu0 0.0
    %128 = vmatpush1.msra.mxu0 %v107
    %129 = vmatprep.subr.mxu0 0.0
    %130 = vmatpush1.msra.mxu0 %v108
    %131 = vmatprep.subr.mxu0 0.0
    %132 = vmatpush1.msra.mxu0 %v109
    %133 = vmatprep.subr.mxu0 0.0
    %134 = vmatpush1.msra.mxu0 %v110
    %135 = vmatprep.subr.mxu0 0.0
    %136 = vmatpush1.msra.mxu0 %v111
    %137 = vmatprep.subr.mxu0 0.0
    %138 = vmatpush1.msra.mxu0 %v112
    %139 = vmatprep.subr.mxu0 0.0
    %140 = vmatpush1.msra.mxu0 %v113
    %141 = vmatprep.subr.mxu0 0.0
    %142 = vmatpush1.msra.mxu0 %v114
    %143 = vmatprep.subr.mxu0 0.0
    %144 = vmatpush1.msra.mxu0 0.0
    %145 = vmatprep.subr.mxu0 0.0
    %146 = vmatpush1.msra.mxu0 0.0
    %147 = vmatprep.subr.mxu0 0.0
    %148 = vmatpush1.msra.mxu0 0.0
    %149 = vmatprep.subr.mxu0 0.0
    %150 = vmatpush1.msra.mxu0 0.0
    %151 = vmatprep.subr.mxu0 0.0
    %152 = vmatpush1.msra.mxu0 0.0
    %153 = vmatprep.subr.mxu0 0.0
    %154 = vmatpush1.msra.mxu0 0.0
    %155 = vmatprep.subr.mxu0 0.0
    %156 = vmatpush1.msra.mxu0 0.0
    %157 = vmatprep.subr.mxu0 0.0
    %158 = vmatpush1.msra.mxu0 0.0
    %159 = vmatprep.subr.mxu0 0.0
    %160 = vmatpush1.msra.mxu0 0.0
    %161 = vmatprep.subr.mxu0 0.0
    %162 = vmatpush1.msra.mxu0 0.0
    %163 = vmatprep.subr.mxu0 0.0
    %164 = vmatpush1.msra.mxu0 0.0
    %165 = vmatprep.subr.mxu0 0.0
    %166 = vmatpush1.msra.mxu0 0.0
    %167 = vmatprep.subr.mxu0 0.0
    %168 = vmatpush1.msra.mxu0 0.0
    %169 = vmatprep.subr.mxu0 0.0
    %170 = vmatpush1.msra.mxu0 0.0
    %171 = vmatprep.subr.mxu0 0.0
    %172 = vmatpush1.msra.mxu0 0.0
    %173 = vmatprep.subr.mxu0 0.0
    %174 = vmatpush1.msra.mxu0 0.0
    %175 = vmatprep.subr.mxu0 0.0
    %176 = vmatpush1.msra.mxu0 0.0
    %177 = vmatprep.subr.mxu0 0.0
    %178 = vmatpush1.msra.mxu0 0.0
    %179 = vmatprep.subr.mxu0 0.0
    %180 = vmatpush1.msra.mxu0 0.0
    %181 = vmatprep.subr.mxu0 0.0
    %182 = vmatpush1.msra.mxu0 0.0
    %183 = vmatprep.subr.mxu0 0.0
    %184 = vmatpush1.msra.mxu0 0.0
    %185 = vmatprep.subr.mxu0 0.0
    %186 = vmatpush1.msra.mxu0 0.0
    %187 = vmatprep.subr.mxu0 0.0
    %188 = vmatpush1.msra.mxu0 0.0
    %189 = vmatprep.subr.mxu0 0.0
    %190 = vmatpush1.msra.mxu0 0.0
    %191 = vmatprep.mubr.f32.mxu0 0.0
    %192 = vmatmul.mubr.f32.gmra.mrb[0].mxu0 %v122
    %v193 = vpop.f32.mrb[0].mxu0
    %v194 = vadd.f32 %v119, %v193
    %v195 = vpop.f32.mrb[0].mxu0
    %196 = vmatprep.mubr.f32.mxu0 0.0
    %197 = vmatmul.mubr.f32.gmra.mrb[0].mxu0 %v125
    %v198 = vpop.f32.mrb[0].mxu0
    %v199 = vadd.f32 %v119, %v198
    %v200 = vpop.f32.mrb[0].mxu0
    %201 = vdwg.mxu0
    %v202 = vmax.f32 %v194, 0.0
    %v203 = vmax.f32 %v199, 0.0
    %v204 = vld [vmem:[%s1 + $0x48] sm:$0xff]
    %v205 = vld [vmem:[%s1 + $0x50] sm:$0xff]
    %v206 = vld [vmem:[%s1 + $0x58] sm:$0xff]
    %v207 = vld [vmem:[%s1 + $0x60] sm:$0xff]
    %v208 = vld [vmem:[%s2 + $0x2] sm:$0x1]
    %v209 = vlaneseq
    %v210 = vshrl.u32 %v209, 7
    %v211 = vsub.s32 0, %v210
    %v212 = vrot.slane %v208, %v211
    %vm213 = vcmask 261120
    %v215 = vsel %vm213, %v202, 0
    %v218 = vsel %vm213, %v203, 0
    %220 = vmatprep.subr.mxu0 0.0
    %221 = vmatpush1.msra.mxu0 %v204
    %222 = vmatprep.subr.mxu0 0.0
    %223 = vmatpush1.msra.mxu0 %v205
    %224 = vmatprep.subr.mxu0 0.0
    %225 = vmatpush1.msra.mxu0 %v206
    %226 = vmatprep.subr.mxu0 0.0
    %227 = vmatpush1.msra.mxu0 %v207
    %228 = vmatprep.subr.mxu0 0.0
    %229 = vmatpush1.msra.mxu0 0.0
    %230 = vmatprep.subr.mxu0 0.0
    %231 = vmatpush1.msra.mxu0 0.0
    %232 = vmatprep.subr.mxu0 0.0
    %233 = vmatpush1.msra.mxu0 0.0
    %234 = vmatprep.subr.mxu0 0.0
    %235 = vmatpush1.msra.mxu0 0.0
    %236 = vmatprep.subr.mxu0 0.0
    %237 = vmatpush1.msra.mxu0 0.0
    %238 = vmatprep.subr.mxu0 0.0
    %239 = vmatpush1.msra.mxu0 0.0
    %240 = vmatprep.subr.mxu0 0.0
    %241 = vmatpush1.msra.mxu0 0.0
    %242 = vmatprep.subr.mxu0 0.0
    %243 = vmatpush1.msra.mxu0 0.0
    %244 = vmatprep.subr.mxu0 0.0
    %245 = vmatpush1.msra.mxu0 0.0
    %246 = vmatprep.subr.mxu0 0.0
    %247 = vmatpush1.msra.mxu0 0.0
    %248 = vmatprep.subr.mxu0 0.0
    %249 = vmatpush1.msra.mxu0 0.0
    %250 = vmatprep.subr.mxu0 0.0
    %251 = vmatpush1.msra.mxu0 0.0
    %252 = vmatprep.subr.mxu0 0.0
    %253 = vmatpush1.msra.mxu0 0.0
    %254 = vmatprep.subr.mxu0 0.0
    %255 = vmatpush1.msra.mxu0 0.0
    %256 = vmatprep.subr.mxu0 0.0
    %257 = vmatpush1.msra.mxu0 0.0
    %258 = vmatprep.subr.mxu0 0.0
    %259 = vmatpush1.msra.mxu0 0.0
    %260 = vmatprep.subr.mxu0 0.0
    %261 = vmatpush1.msra.mxu0 0.0
    %262 = vmatprep.subr.mxu0 0.0
    %263 = vmatpush1.msra.mxu0 0.0
    %264 = vmatprep.subr.mxu0 0.0
    %265 = vmatpush1.msra.mxu0 0.0
    %266 = vmatprep.subr.mxu0 0.0
    %267 = vmatpush1.msra.mxu0 0.0
    %268 = vmatprep.subr.mxu0 0.0
    %269 = vmatpush1.msra.mxu0 0.0
    %270 = vmatprep.subr.mxu0 0.0
    %271 = vmatpush1.msra.mxu0 0.0
    %272 = vmatprep.subr.mxu0 0.0
    %273 = vmatpush1.msra.mxu0 0.0
    %274 = vmatprep.subr.mxu0 0.0
    %275 = vmatpush1.msra.mxu0 0.0
    %276 = vmatprep.subr.mxu0 0.0
    %277 = vmatpush1.msra.mxu0 0.0
    %278 = vmatprep.subr.mxu0 0.0
    %279 = vmatpush1.msra.mxu0 0.0
    %280 = vmatprep.subr.mxu0 0.0
    %281 = vmatpush1.msra.mxu0 0.0
    %282 = vmatprep.subr.mxu0 0.0
    %283 = vmatpush1.msra.mxu0 0.0
    %284 = vmatprep.mubr.f32.mxu0 0.0
    %285 = vmatmul.mubr.f32.gmra.mrb[0].mxu0 %v215
    %v286 = vpop.f32.mrb[0].mxu0
    %v287 = vadd.f32 %v212, %v286
    %v288 = vpop.f32.mrb[0].mxu0
    %289 = vmatprep.mubr.f32.mxu0 0.0
    %290 = vmatmul.mubr.f32.gmra.mrb[0].mxu0 %v218
    %v291 = vpop.f32.mrb[0].mxu0
    %v292 = vadd.f32 %v212, %v291
    %v293 = vpop.f32.mrb[0].mxu0
    %294 = vdwg.mxu0
    %v295 = vld [vmem:[%s1 + $0x68] sm:$0xff]
    %v296 = vld [vmem:[%s1 + $0x70] sm:$0xff]
    %v297 = vld [vmem:[%s1 + $0x78] sm:$0xff]
    %v298 = vld [vmem:[%s1 + $0x80] sm:$0xff]
    %v299 = vld [vmem:[%s1 + $0x88] sm:$0xff]
    %v300 = vld [vmem:[%s1 + $0x90] sm:$0xff]
    %v301 = vld [vmem:[%s1 + $0x98] sm:$0xff]
    %v302 = vld [vmem:[%s1 + $0xa0] sm:$0xff]
    %v304 = vsel %vm120, %v97, 0
    %v307 = vsel %vm120, %v102, 0
    %309 = vmatprep.subr.mxu0 0.0
    %310 = vmatpush1.msra.mxu0 %v295
    %311 = vmatprep.subr.mxu0 0.0
    %312 = vmatpush1.msra.mxu0 %v296
    %313 = vmatprep.subr.mxu0 0.0
    %314 = vmatpush1.msra.mxu0 %v297
    %315 = vmatprep.subr.mxu0 0.0
    %316 = vmatpush1.msra.mxu0 %v298
    %317 = vmatprep.subr.mxu0 0.0
    %318 = vmatpush1.msra.mxu0 %v299
    %319 = vmatprep.subr.mxu0 0.0
    %320 = vmatpush1.msra.mxu0 %v300
    %321 = vmatprep.subr.mxu0 0.0
    %322 = vmatpush1.msra.mxu0 %v301
    %323 = vmatprep.subr.mxu0 0.0
    %324 = vmatpush1.msra.mxu0 %v302
    %325 = vmatprep.subr.mxu0 0.0
    %326 = vmatpush1.msra.mxu0 0.0
    %327 = vmatprep.subr.mxu0 0.0
    %328 = vmatpush1.msra.mxu0 0.0
    %329 = vmatprep.subr.mxu0 0.0
    %330 = vmatpush1.msra.mxu0 0.0
    %331 = vmatprep.subr.mxu0 0.0
    %332 = vmatpush1.msra.mxu0 0.0
    %333 = vmatprep.subr.mxu0 0.0
    %334 = vmatpush1.msra.mxu0 0.0
    %335 = vmatprep.subr.mxu0 0.0
    %336 = vmatpush1.msra.mxu0 0.0
    %337 = vmatprep.subr.mxu0 0.0
    %338 = vmatpush1.msra.mxu0 0.0
    %339 = vmatprep.subr.mxu0 0.0
    %340 = vmatpush1.msra.mxu0 0.0
    %341 = vmatprep.subr.mxu0 0.0
    %342 = vmatpush1.msra.mxu0 0.0
    %343 = vmatprep.subr.mxu0 0.0
    %344 = vmatpush1.msra.mxu0 0.0
    %345 = vmatprep.subr.mxu0 0.0
    %346 = vmatpush1.msra.mxu0 0.0
    %347 = vmatprep.subr.mxu0 0.0
    %348 = vmatpush1.msra.mxu0 0.0
    %349 = vmatprep.subr.mxu0 0.0
    %350 = vmatpush1.msra.mxu0 0.0
    %351 = vmatprep.subr.mxu0 0.0
    %352 = vmatpush1.msra.mxu0 0.0
    %353 = vmatprep.subr.mxu0 0.0
    %354 = vmatpush1.msra.mxu0 0.0
    %355 = vmatprep.subr.mxu0 0.0
    %356 = vmatpush1.msra.mxu0 0.0
    %357 = vmatprep.subr.mxu0 0.0
    %358 = vmatpush1.msra.mxu0 0.0
    %359 = vmatprep.subr.mxu0 0.0
    %360 = vmatpush1.msra.mxu0 0.0
    %361 = vmatprep.subr.mxu0 0.0
    %362 = vmatpush1.msra.mxu0 0.0
    %363 = vmatprep.subr.mxu0 0.0
    %364 = vmatpush1.msra.mxu0 0.0
    %365 = vmatprep.subr.mxu0 0.0
    %366 = vmatpush1.msra.mxu0 0.0
    %367 = vmatprep.subr.mxu0 0.0
    %368 = vmatpush1.msra.mxu0 0.0
    %369 = vmatprep.subr.mxu0 0.0
    %370 = vmatpush1.msra.mxu0 0.0
    %371 = vmatprep.subr.mxu0 0.0
    %372 = vmatpush1.msra.mxu0 0.0
    %373 = vmatprep.mubr.f32.mxu0 0.0
    %374 = vmatmul.mubr.f32.gmra.mrb[0].mxu0 %v304
    %v375 = vpop.f32.mrb[0].mxu0
    %v376 = vadd.f32 %v287, %v375
    %v377 = vpop.f32.mrb[0].mxu0
    %378 = vmatprep.mubr.f32.mxu0 0.0
    %379 = vmatmul.mubr.f32.gmra.mrb[0].mxu0 %v307
    %v380 = vpop.f32.mrb[0].mxu0
    %v381 = vadd.f32 %v292, %v380
    %v382 = vpop.f32.mrb[0].mxu0
    %383 = vdwg.mxu0
    %v384 = vsel %vm213, %v376, -inf
    %v385 = vrot.slane %v384, 4
    %v386 = vmax.f32 %v384, %v385
    %v387 = vrot.slane %v386, 2
    %v388 = vmax.f32 %v386, %v387
    %v389 = vrot.slane %v388, 1
    %v390 = vmax.f32 %v388, %v389
    %v391 = vsel %vm213, %v381, -inf
    %v392 = vrot.slane %v391, 4
    %v393 = vmax.f32 %v391, %v392
    %v394 = vrot.slane %v393, 2
    %v395 = vmax.f32 %v393, %v394
    %v396 = vrot.slane %v395, 1
    %v397 = vmax.f32 %v395, %v396
    %v398 = vmax.f32 %v376, 0.0
    %v399 = vmax.f32 %v381, 0.0
    %v400 = vld [vmem:[%s1 + $0xa8] sm:$0xff]
    %v401 = vld [vmem:[%s1 + $0xb0] sm:$0xff]
    %v402 = vld [vmem:[%s1 + $0xb8] sm:$0xff]
    %v403 = vld [vmem:[%s1 + $0xc0] sm:$0xff]
    %v404 = vmax.f32 %v390, 0.0
    %v405 = vmax.f32 %v397, 0.0
    %v406 = vld [vmem:[%s1 + $0xc8] sm:$0xff]
    %v407 = vld [vmem:[%s1 + $0xd0] sm:$0xff]
    %v408 = vld [vmem:[%s1 + $0xd8] sm:$0xff]
    %v409 = vld [vmem:[%s1 + $0xe0] sm:$0xff]
    %vm412 = vcmask 1041409
    %v413 = vsel %vm412, %v405, %v404
    %v414 = vsel %vm213, %v413, 0
    %416 = vmatprep.subr.mxu0 0.0
    %417 = vmatpush1.msra.mxu0 %v406
    %418 = vmatprep.subr.mxu0 0.0
    %419 = vmatpush1.msra.mxu0 %v407
    %420 = vmatprep.subr.mxu0 0.0
    %421 = vmatpush1.msra.mxu0 %v408
    %422 = vmatprep.subr.mxu0 0.0
    %423 = vmatpush1.msra.mxu0 %v409
    %424 = vmatprep.subr.mxu0 0.0
    %425 = vmatpush1.msra.mxu0 0.0
    %426 = vmatprep.subr.mxu0 0.0
    %427 = vmatpush1.msra.mxu0 0.0
    %428 = vmatprep.subr.mxu0 0.0
    %429 = vmatpush1.msra.mxu0 0.0
    %430 = vmatprep.subr.mxu0 0.0
    %431 = vmatpush1.msra.mxu0 0.0
    %432 = vmatprep.subr.mxu0 0.0
    %433 = vmatpush1.msra.mxu0 0.0
    %434 = vmatprep.subr.mxu0 0.0
    %435 = vmatpush1.msra.mxu0 0.0
    %436 = vmatprep.subr.mxu0 0.0
    %437 = vmatpush1.msra.mxu0 0.0
    %438 = vmatprep.subr.mxu0 0.0
    %439 = vmatpush1.msra.mxu0 0.0
    %440 = vmatprep.subr.mxu0 0.0
    %441 = vmatpush1.msra.mxu0 0.0
    %442 = vmatprep.subr.mxu0 0.0
    %443 = vmatpush1.msra.mxu0 0.0
    %444 = vmatprep.subr.mxu0 0.0
    %445 = vmatpush1.msra.mxu0 0.0
    %446 = vmatprep.subr.mxu0 0.0
    %447 = vmatpush1.msra.mxu0 0.0
    %448 = vmatprep.subr.mxu0 0.0
    %449 = vmatpush1.msra.mxu0 0.0
    %450 = vmatprep.subr.mxu0 0.0
    %451 = vmatpush1.msra.mxu0 0.0
    %452 = vmatprep.subr.mxu0 0.0
    %453 = vmatpush1.msra.mxu0 0.0
    %454 = vmatprep.subr.mxu0 0.0
    %455 = vmatpush1.msra.mxu0 0.0
    %456 = vmatprep.subr.mxu0 0.0
    %457 = vmatpush1.msra.mxu0 0.0
    %458 = vmatprep.subr.mxu0 0.0
    %459 = vmatpush1.msra.mxu0 0.0
    %460 = vmatprep.subr.mxu0 0.0
    %461 = vmatpush1.msra.mxu0 0.0
    %462 = vmatprep.subr.mxu0 0.0
    %463 = vmatpush1.msra.mxu0 0.0
    %464 = vmatprep.subr.mxu0 0.0
    %465 = vmatpush1.msra.mxu0 0.0
    %466 = vmatprep.subr.mxu0 0.0
    %467 = vmatpush1.msra.mxu0 0.0
    %468 = vmatprep.subr.mxu0 0.0
    %469 = vmatpush1.msra.mxu0 0.0
    %470 = vmatprep.subr.mxu0 0.0
    %471 = vmatpush1.msra.mxu0 0.0
    %472 = vmatprep.subr.mxu0 0.0
    %473 = vmatpush1.msra.mxu0 0.0
    %474 = vmatprep.subr.mxu0 0.0
    %475 = vmatpush1.msra.mxu0 0.0
    %476 = vmatprep.subr.mxu0 0.0
    %477 = vmatpush1.msra.mxu0 0.0
    %478 = vmatprep.subr.mxu0 0.0
    %479 = vmatpush1.msra.mxu0 0.0
    %480 = vmatprep.mubr.f32.mxu0 0.0
    %481 = vmatmul.mubr.f32.gmra.mrb[0].mxu0 %v414
    %v482 = vpop.f32.mrb[0].mxu0
    %v483 = vadd.f32 0.0, %v482
    %v484 = vpop.f32.mrb[0].mxu0
    %485 = vdwg.mxu0
    %v488 = vunpack.c.l.s4 1966171168
    %v489 = vunpack.c.0.s8 %v488
    %v490 = vlaneseq
    %v491 = vshrl.u32 %v490, 7
    %v492 = vsub.s32 %v489, %v491
    %v493 = vrot.slane %v483, %v492
    %v494 = vcombine.high %v493, %v493
    %v496 = vunpack.c.l.s4 1966171168
    %v497 = vunpack.c.0.s8 %v496
    %v498 = vlaneseq
    %v499 = vshrl.u32 %v498, 7
    %v500 = vsub.s32 %v497, %v499
    %v501 = vrot.slane %v493, %v500
    %v503 = vunpack.c.l.s4 1966171168
    %v504 = vunpack.c.0.s8 %v503
    %v505 = vlaneseq
    %v506 = vshrl.u32 %v505, 7
    %v507 = vsub.s32 %v504, %v506
    %v508 = vrot.slane %v494, %v507
    %v509 = vlaneseq
    %v510 = vshrl.u32 %v509, 7
    %v511 = vsub.s32 0, %v510
    %v512 = vrot.slane %v501, %v511
    %v513 = vlaneseq
    %v514 = vshrl.u32 %v513, 7
    %v515 = vsub.s32 0, %v514
    %v516 = vrot.slane %v508, %v515
    %v520 = vsel %vm213, %v398, 0
    %v523 = vsel %vm213, %v399, 0
    %525 = vmatprep.subr.mxu0 0.0
    %526 = vmatpush1.msra.mxu0 %v400
    %527 = vmatprep.subr.mxu0 0.0
    %528 = vmatpush1.msra.mxu0 %v401
    %529 = vmatprep.subr.mxu0 0.0
    %530 = vmatpush1.msra.mxu0 %v402
    %531 = vmatprep.subr.mxu0 0.0
    %532 = vmatpush1.msra.mxu0 %v403
    %533 = vmatprep.subr.mxu0 0.0
    %534 = vmatpush1.msra.mxu0 0.0
    %535 = vmatprep.subr.mxu0 0.0
    %536 = vmatpush1.msra.mxu0 0.0
    %537 = vmatprep.subr.mxu0 0.0
    %538 = vmatpush1.msra.mxu0 0.0
    %539 = vmatprep.subr.mxu0 0.0
    %540 = vmatpush1.msra.mxu0 0.0
    %541 = vmatprep.subr.mxu0 0.0
    %542 = vmatpush1.msra.mxu0 0.0
    %543 = vmatprep.subr.mxu0 0.0
    %544 = vmatpush1.msra.mxu0 0.0
    %545 = vmatprep.subr.mxu0 0.0
    %546 = vmatpush1.msra.mxu0 0.0
    %547 = vmatprep.subr.mxu0 0.0
    %548 = vmatpush1.msra.mxu0 0.0
    %549 = vmatprep.subr.mxu0 0.0
    %550 = vmatpush1.msra.mxu0 0.0
    %551 = vmatprep.subr.mxu0 0.0
    %552 = vmatpush1.msra.mxu0 0.0
    %553 = vmatprep.subr.mxu0 0.0
    %554 = vmatpush1.msra.mxu0 0.0
    %555 = vmatprep.subr.mxu0 0.0
    %556 = vmatpush1.msra.mxu0 0.0
    %557 = vmatprep.subr.mxu0 0.0
    %558 = vmatpush1.msra.mxu0 0.0
    %559 = vmatprep.subr.mxu0 0.0
    %560 = vmatpush1.msra.mxu0 0.0
    %561 = vmatprep.subr.mxu0 0.0
    %562 = vmatpush1.msra.mxu0 0.0
    %563 = vmatprep.subr.mxu0 0.0
    %564 = vmatpush1.msra.mxu0 0.0
    %565 = vmatprep.subr.mxu0 0.0
    %566 = vmatpush1.msra.mxu0 0.0
    %567 = vmatprep.subr.mxu0 0.0
    %568 = vmatpush1.msra.mxu0 0.0
    %569 = vmatprep.subr.mxu0 0.0
    %570 = vmatpush1.msra.mxu0 0.0
    %571 = vmatprep.subr.mxu0 0.0
    %572 = vmatpush1.msra.mxu0 0.0
    %573 = vmatprep.subr.mxu0 0.0
    %574 = vmatpush1.msra.mxu0 0.0
    %575 = vmatprep.subr.mxu0 0.0
    %576 = vmatpush1.msra.mxu0 0.0
    %577 = vmatprep.subr.mxu0 0.0
    %578 = vmatpush1.msra.mxu0 0.0
    %579 = vmatprep.subr.mxu0 0.0
    %580 = vmatpush1.msra.mxu0 0.0
    %581 = vmatprep.subr.mxu0 0.0
    %582 = vmatpush1.msra.mxu0 0.0
    %583 = vmatprep.subr.mxu0 0.0
    %584 = vmatpush1.msra.mxu0 0.0
    %585 = vmatprep.subr.mxu0 0.0
    %586 = vmatpush1.msra.mxu0 0.0
    %587 = vmatprep.subr.mxu0 0.0
    %588 = vmatpush1.msra.mxu0 0.0
    %589 = vmatprep.mubr.f32.mxu0 0.0
    %590 = vmatmul.mubr.f32.gmra.mrb[0].mxu0 %v520
    %v591 = vpop.f32.mrb[0].mxu0
    %v592 = vadd.f32 %v512, %v591
    %v593 = vpop.f32.mrb[0].mxu0
    %594 = vmatprep.mubr.f32.mxu0 0.0
    %595 = vmatmul.mubr.f32.gmra.mrb[0].mxu0 %v523
    %v596 = vpop.f32.mrb[0].mxu0
    %v597 = vadd.f32 %v516, %v596
    %v598 = vpop.f32.mrb[0].mxu0
    %599 = vdwg.mxu0
    %v600 = vld [vmem:[%s2 + $0x3] sm:$0x1]
    %v601 = vlaneseq
    %v602 = vshrl.u32 %v601, 7
    %v603 = vsub.s32 0, %v602
    %v604 = vrot.slane %v600, %v603
    %v605 = vadd.f32 %v592, %v604
    %v606 = vadd.f32 %v597, %v604
    %v607 = vmax.f32 %v605, 0.0
    %v608 = vmax.f32 %v606, 0.0
    %v609 = vld [vmem:[%s1 + $0xe8] sm:$0xff]
    %v610 = vld [vmem:[%s1 + $0xf0] sm:$0xff]
    %v611 = vld [vmem:[%s1 + $0xf8] sm:$0xff]
    %v612 = vld [vmem:[%s1 + $0x100] sm:$0xff]
    %v613 = vld [vmem:[%s2 + $0x4] sm:$0x1]
    %v614 = vlaneseq
    %v615 = vshrl.u32 %v614, 7
    %v616 = vsub.s32 0, %v615
    %v617 = vrot.slane %v613, %v616
    %v619 = vsel %vm213, %v607, 0
    %v622 = vsel %vm213, %v608, 0
    %624 = vmatprep.subr.mxu0 0.0
    %625 = vmatpush1.msra.mxu0 %v609
    %626 = vmatprep.subr.mxu0 0.0
    %627 = vmatpush1.msra.mxu0 %v610
    %628 = vmatprep.subr.mxu0 0.0
    %629 = vmatpush1.msra.mxu0 %v611
    %630 = vmatprep.subr.mxu0 0.0
    %631 = vmatpush1.msra.mxu0 %v612
    %632 = vmatprep.subr.mxu0 0.0
    %633 = vmatpush1.msra.mxu0 0.0
    %634 = vmatprep.subr.mxu0 0.0
    %635 = vmatpush1.msra.mxu0 0.0
    %636 = vmatprep.subr.mxu0 0.0
    %637 = vmatpush1.msra.mxu0 0.0
    %638 = vmatprep.subr.mxu0 0.0
    %639 = vmatpush1.msra.mxu0 0.0
    %640 = vmatprep.subr.mxu0 0.0
    %641 = vmatpush1.msra.mxu0 0.0
    %642 = vmatprep.subr.mxu0 0.0
    %643 = vmatpush1.msra.mxu0 0.0
    %644 = vmatprep.subr.mxu0 0.0
    %645 = vmatpush1.msra.mxu0 0.0
    %646 = vmatprep.subr.mxu0 0.0
    %647 = vmatpush1.msra.mxu0 0.0
    %648 = vmatprep.subr.mxu0 0.0
    %649 = vmatpush1.msra.mxu0 0.0
    %650 = vmatprep.subr.mxu0 0.0
    %651 = vmatpush1.msra.mxu0 0.0
    %652 = vmatprep.subr.mxu0 0.0
    %653 = vmatpush1.msra.mxu0 0.0
    %654 = vmatprep.subr.mxu0 0.0
    %655 = vmatpush1.msra.mxu0 0.0
    %656 = vmatprep.subr.mxu0 0.0
    %657 = vmatpush1.msra.mxu0 0.0
    %658 = vmatprep.subr.mxu0 0.0
    %659 = vmatpush1.msra.mxu0 0.0
    %660 = vmatprep.subr.mxu0 0.0
    %661 = vmatpush1.msra.mxu0 0.0
    %662 = vmatprep.subr.mxu0 0.0
    %663 = vmatpush1.msra.mxu0 0.0
    %664 = vmatprep.subr.mxu0 0.0
    %665 = vmatpush1.msra.mxu0 0.0
    %666 = vmatprep.subr.mxu0 0.0
    %667 = vmatpush1.msra.mxu0 0.0
    %668 = vmatprep.subr.mxu0 0.0
    %669 = vmatpush1.msra.mxu0 0.0
    %670 = vmatprep.subr.mxu0 0.0
    %671 = vmatpush1.msra.mxu0 0.0
    %672 = vmatprep.subr.mxu0 0.0
    %673 = vmatpush1.msra.mxu0 0.0
    %674 = vmatprep.subr.mxu0 0.0
    %675 = vmatpush1.msra.mxu0 0.0
    %676 = vmatprep.subr.mxu0 0.0
    %677 = vmatpush1.msra.mxu0 0.0
    %678 = vmatprep.subr.mxu0 0.0
    %679 = vmatpush1.msra.mxu0 0.0
    %680 = vmatprep.subr.mxu0 0.0
    %681 = vmatpush1.msra.mxu0 0.0
    %682 = vmatprep.subr.mxu0 0.0
    %683 = vmatpush1.msra.mxu0 0.0
    %684 = vmatprep.subr.mxu0 0.0
    %685 = vmatpush1.msra.mxu0 0.0
    %686 = vmatprep.subr.mxu0 0.0
    %687 = vmatpush1.msra.mxu0 0.0
    %688 = vmatprep.mubr.f32.mxu0 0.0
    %689 = vmatmul.mubr.f32.gmra.mrb[0].mxu0 %v619
    %v690 = vpop.f32.mrb[0].mxu0
    %v691 = vadd.f32 %v617, %v690
    %v692 = vpop.f32.mrb[0].mxu0
    %693 = vmatprep.mubr.f32.mxu0 0.0
    %694 = vmatmul.mubr.f32.gmra.mrb[0].mxu0 %v622
    %v695 = vpop.f32.mrb[0].mxu0
    %v696 = vadd.f32 %v617, %v695
    %v697 = vpop.f32.mrb[0].mxu0
    %698 = vdwg.mxu0
    %v699 = vld [vmem:[%s1 + $0x108] sm:$0xff]
    %v700 = vld [vmem:[%s1 + $0x110] sm:$0xff]
    %v701 = vld [vmem:[%s1 + $0x118] sm:$0xff]
    %v702 = vld [vmem:[%s1 + $0x120] sm:$0xff]
    %v703 = vld [vmem:[%s1 + $0x128] sm:$0xff]
    %v704 = vld [vmem:[%s1 + $0x130] sm:$0xff]
    %v705 = vld [vmem:[%s1 + $0x138] sm:$0xff]
    %v706 = vld [vmem:[%s1 + $0x140] sm:$0xff]
    %v709 = vsel %vm412, %v397, %v390
    %v710 = vsel %vm213, %v709, 0
    %712 = vmatprep.subr.mxu0 0.0
    %713 = vmatpush1.msra.mxu0 %v703
    %714 = vmatprep.subr.mxu0 0.0
    %715 = vmatpush1.msra.mxu0 %v704
    %716 = vmatprep.subr.mxu0 0.0
    %717 = vmatpush1.msra.mxu0 %v705
    %718 = vmatprep.subr.mxu0 0.0
    %719 = vmatpush1.msra.mxu0 %v706
    %720 = vmatprep.subr.mxu0 0.0
    %721 = vmatpush1.msra.mxu0 0.0
    %722 = vmatprep.subr.mxu0 0.0
    %723 = vmatpush1.msra.mxu0 0.0
    %724 = vmatprep.subr.mxu0 0.0
    %725 = vmatpush1.msra.mxu0 0.0
    %726 = vmatprep.subr.mxu0 0.0
    %727 = vmatpush1.msra.mxu0 0.0
    %728 = vmatprep.subr.mxu0 0.0
    %729 = vmatpush1.msra.mxu0 0.0
    %730 = vmatprep.subr.mxu0 0.0
    %731 = vmatpush1.msra.mxu0 0.0
    %732 = vmatprep.subr.mxu0 0.0
    %733 = vmatpush1.msra.mxu0 0.0
    %734 = vmatprep.subr.mxu0 0.0
    %735 = vmatpush1.msra.mxu0 0.0
    %736 = vmatprep.subr.mxu0 0.0
    %737 = vmatpush1.msra.mxu0 0.0
    %738 = vmatprep.subr.mxu0 0.0
    %739 = vmatpush1.msra.mxu0 0.0
    %740 = vmatprep.subr.mxu0 0.0
    %741 = vmatpush1.msra.mxu0 0.0
    %742 = vmatprep.subr.mxu0 0.0
    %743 = vmatpush1.msra.mxu0 0.0
    %744 = vmatprep.subr.mxu0 0.0
    %745 = vmatpush1.msra.mxu0 0.0
    %746 = vmatprep.subr.mxu0 0.0
    %747 = vmatpush1.msra.mxu0 0.0
    %748 = vmatprep.subr.mxu0 0.0
    %749 = vmatpush1.msra.mxu0 0.0
    %750 = vmatprep.subr.mxu0 0.0
    %751 = vmatpush1.msra.mxu0 0.0
    %752 = vmatprep.subr.mxu0 0.0
    %753 = vmatpush1.msra.mxu0 0.0
    %754 = vmatprep.subr.mxu0 0.0
    %755 = vmatpush1.msra.mxu0 0.0
    %756 = vmatprep.subr.mxu0 0.0
    %757 = vmatpush1.msra.mxu0 0.0
    %758 = vmatprep.subr.mxu0 0.0
    %759 = vmatpush1.msra.mxu0 0.0
    %760 = vmatprep.subr.mxu0 0.0
    %761 = vmatpush1.msra.mxu0 0.0
    %762 = vmatprep.subr.mxu0 0.0
    %763 = vmatpush1.msra.mxu0 0.0
    %764 = vmatprep.subr.mxu0 0.0
    %765 = vmatpush1.msra.mxu0 0.0
    %766 = vmatprep.subr.mxu0 0.0
    %767 = vmatpush1.msra.mxu0 0.0
    %768 = vmatprep.subr.mxu0 0.0
    %769 = vmatpush1.msra.mxu0 0.0
    %770 = vmatprep.subr.mxu0 0.0
    %771 = vmatpush1.msra.mxu0 0.0
    %772 = vmatprep.subr.mxu0 0.0
    %773 = vmatpush1.msra.mxu0 0.0
    %774 = vmatprep.subr.mxu0 0.0
    %775 = vmatpush1.msra.mxu0 0.0
    %776 = vmatprep.mubr.f32.mxu0 0.0
    %777 = vmatmul.mubr.f32.gmra.mrb[0].mxu0 %v710
    %v778 = vpop.f32.mrb[0].mxu0
    %v779 = vadd.f32 0.0, %v778
    %v780 = vpop.f32.mrb[0].mxu0
    %781 = vdwg.mxu0
    %v784 = vunpack.c.l.s4 1966171168
    %v785 = vunpack.c.0.s8 %v784
    %v786 = vlaneseq
    %v787 = vshrl.u32 %v786, 7
    %v788 = vsub.s32 %v785, %v787
    %v789 = vrot.slane %v779, %v788
    %v790 = vcombine.high %v789, %v789
    %v792 = vunpack.c.l.s4 1966171168
    %v793 = vunpack.c.0.s8 %v792
    %v794 = vlaneseq
    %v795 = vshrl.u32 %v794, 7
    %v796 = vsub.s32 %v793, %v795
    %v797 = vrot.slane %v789, %v796
    %v799 = vunpack.c.l.s4 1966171168
    %v800 = vunpack.c.0.s8 %v799
    %v801 = vlaneseq
    %v802 = vshrl.u32 %v801, 7
    %v803 = vsub.s32 %v800, %v802
    %v804 = vrot.slane %v790, %v803
    %v805 = vlaneseq
    %v806 = vshrl.u32 %v805, 7
    %v807 = vsub.s32 0, %v806
    %v808 = vrot.slane %v797, %v807
    %v809 = vlaneseq
    %v810 = vshrl.u32 %v809, 7
    %v811 = vsub.s32 0, %v810
    %v812 = vrot.slane %v804, %v811
    %v816 = vsel %vm213, %v376, 0
    %v819 = vsel %vm213, %v381, 0
    %821 = vmatprep.subr.mxu0 0.0
    %822 = vmatpush1.msra.mxu0 %v699
    %823 = vmatprep.subr.mxu0 0.0
    %824 = vmatpush1.msra.mxu0 %v700
    %825 = vmatprep.subr.mxu0 0.0
    %826 = vmatpush1.msra.mxu0 %v701
    %827 = vmatprep.subr.mxu0 0.0
    %828 = vmatpush1.msra.mxu0 %v702
    %829 = vmatprep.subr.mxu0 0.0
    %830 = vmatpush1.msra.mxu0 0.0
    %831 = vmatprep.subr.mxu0 0.0
    %832 = vmatpush1.msra.mxu0 0.0
    %833 = vmatprep.subr.mxu0 0.0
    %834 = vmatpush1.msra.mxu0 0.0
    %835 = vmatprep.subr.mxu0 0.0
    %836 = vmatpush1.msra.mxu0 0.0
    %837 = vmatprep.subr.mxu0 0.0
    %838 = vmatpush1.msra.mxu0 0.0
    %839 = vmatprep.subr.mxu0 0.0
    %840 = vmatpush1.msra.mxu0 0.0
    %841 = vmatprep.subr.mxu0 0.0
    %842 = vmatpush1.msra.mxu0 0.0
    %843 = vmatprep.subr.mxu0 0.0
    %844 = vmatpush1.msra.mxu0 0.0
    %845 = vmatprep.subr.mxu0 0.0
    %846 = vmatpush1.msra.mxu0 0.0
    %847 = vmatprep.subr.mxu0 0.0
    %848 = vmatpush1.msra.mxu0 0.0
    %849 = vmatprep.subr.mxu0 0.0
    %850 = vmatpush1.msra.mxu0 0.0
    %851 = vmatprep.subr.mxu0 0.0
    %852 = vmatpush1.msra.mxu0 0.0
    %853 = vmatprep.subr.mxu0 0.0
    %854 = vmatpush1.msra.mxu0 0.0
    %855 = vmatprep.subr.mxu0 0.0
    %856 = vmatpush1.msra.mxu0 0.0
    %857 = vmatprep.subr.mxu0 0.0
    %858 = vmatpush1.msra.mxu0 0.0
    %859 = vmatprep.subr.mxu0 0.0
    %860 = vmatpush1.msra.mxu0 0.0
    %861 = vmatprep.subr.mxu0 0.0
    %862 = vmatpush1.msra.mxu0 0.0
    %863 = vmatprep.subr.mxu0 0.0
    %864 = vmatpush1.msra.mxu0 0.0
    %865 = vmatprep.subr.mxu0 0.0
    %866 = vmatpush1.msra.mxu0 0.0
    %867 = vmatprep.subr.mxu0 0.0
    %868 = vmatpush1.msra.mxu0 0.0
    %869 = vmatprep.subr.mxu0 0.0
    %870 = vmatpush1.msra.mxu0 0.0
    %871 = vmatprep.subr.mxu0 0.0
    %872 = vmatpush1.msra.mxu0 0.0
    %873 = vmatprep.subr.mxu0 0.0
    %874 = vmatpush1.msra.mxu0 0.0
    %875 = vmatprep.subr.mxu0 0.0
    %876 = vmatpush1.msra.mxu0 0.0
    %877 = vmatprep.subr.mxu0 0.0
    %878 = vmatpush1.msra.mxu0 0.0
    %879 = vmatprep.subr.mxu0 0.0
    %880 = vmatpush1.msra.mxu0 0.0
    %881 = vmatprep.subr.mxu0 0.0
    %882 = vmatpush1.msra.mxu0 0.0
    %883 = vmatprep.subr.mxu0 0.0
    %884 = vmatpush1.msra.mxu0 0.0
    %885 = vmatprep.mubr.f32.mxu0 0.0
    %886 = vmatmul.mubr.f32.gmra.mrb[0].mxu0 %v816
    %v887 = vpop.f32.mrb[0].mxu0
    %v888 = vadd.f32 %v808, %v887
    %v889 = vpop.f32.mrb[0].mxu0
    %890 = vmatprep.mubr.f32.mxu0 0.0
    %891 = vmatmul.mubr.f32.gmra.mrb[0].mxu0 %v819
    %v892 = vpop.f32.mrb[0].mxu0
    %v893 = vadd.f32 %v812, %v892
    %v894 = vpop.f32.mrb[0].mxu0
    %895 = vdwg.mxu0
    %v896 = vadd.f32 %v888, %v691
    %v897 = vadd.f32 %v893, %v696
    %v898 = vsel %vm213, %v896, -inf
    %v899 = vrot.slane %v898, 4
    %v900 = vmax.f32 %v898, %v899
    %v901 = vrot.slane %v900, 2
    %v902 = vmax.f32 %v900, %v901
    %v903 = vrot.slane %v902, 1
    %v904 = vmax.f32 %v902, %v903
    %v905 = vsel %vm213, %v897, -inf
    %v906 = vrot.slane %v905, 4
    %v907 = vmax.f32 %v905, %v906
    %v908 = vrot.slane %v907, 2
    %v909 = vmax.f32 %v907, %v908
    %v910 = vrot.slane %v909, 1
    %v911 = vmax.f32 %v909, %v910
    %v912 = vmax.f32 %v896, 0.0
    %v913 = vmax.f32 %v897, 0.0
    %v914 = vld [vmem:[%s1 + $0x148] sm:$0xff]
    %v915 = vld [vmem:[%s1 + $0x150] sm:$0xff]
    %v916 = vld [vmem:[%s1 + $0x158] sm:$0xff]
    %v917 = vld [vmem:[%s1 + $0x160] sm:$0xff]
    %v918 = vmax.f32 %v904, 0.0
    %v919 = vmax.f32 %v911, 0.0
    %v920 = vld [vmem:[%s1 + $0x168] sm:$0xff]
    %v921 = vld [vmem:[%s1 + $0x170] sm:$0xff]
    %v922 = vld [vmem:[%s1 + $0x178] sm:$0xff]
    %v923 = vld [vmem:[%s1 + $0x180] sm:$0xff]
    %v926 = vsel %vm412, %v919, %v918
    %v927 = vsel %vm213, %v926, 0
    %929 = vmatprep.subr.mxu0 0.0
    %930 = vmatpush1.msra.mxu0 %v920
    %931 = vmatprep.subr.mxu0 0.0
    %932 = vmatpush1.msra.mxu0 %v921
    %933 = vmatprep.subr.mxu0 0.0
    %934 = vmatpush1.msra.mxu0 %v922
    %935 = vmatprep.subr.mxu0 0.0
    %936 = vmatpush1.msra.mxu0 %v923
    %937 = vmatprep.subr.mxu0 0.0
    %938 = vmatpush1.msra.mxu0 0.0
    %939 = vmatprep.subr.mxu0 0.0
    %940 = vmatpush1.msra.mxu0 0.0
    %941 = vmatprep.subr.mxu0 0.0
    %942 = vmatpush1.msra.mxu0 0.0
    %943 = vmatprep.subr.mxu0 0.0
    %944 = vmatpush1.msra.mxu0 0.0
    %945 = vmatprep.subr.mxu0 0.0
    %946 = vmatpush1.msra.mxu0 0.0
    %947 = vmatprep.subr.mxu0 0.0
    %948 = vmatpush1.msra.mxu0 0.0
    %949 = vmatprep.subr.mxu0 0.0
    %950 = vmatpush1.msra.mxu0 0.0
    %951 = vmatprep.subr.mxu0 0.0
    %952 = vmatpush1.msra.mxu0 0.0
    %953 = vmatprep.subr.mxu0 0.0
    %954 = vmatpush1.msra.mxu0 0.0
    %955 = vmatprep.subr.mxu0 0.0
    %956 = vmatpush1.msra.mxu0 0.0
    %957 = vmatprep.subr.mxu0 0.0
    %958 = vmatpush1.msra.mxu0 0.0
    %959 = vmatprep.subr.mxu0 0.0
    %960 = vmatpush1.msra.mxu0 0.0
    %961 = vmatprep.subr.mxu0 0.0
    %962 = vmatpush1.msra.mxu0 0.0
    %963 = vmatprep.subr.mxu0 0.0
    %964 = vmatpush1.msra.mxu0 0.0
    %965 = vmatprep.subr.mxu0 0.0
    %966 = vmatpush1.msra.mxu0 0.0
    %967 = vmatprep.subr.mxu0 0.0
    %968 = vmatpush1.msra.mxu0 0.0
    %969 = vmatprep.subr.mxu0 0.0
    %970 = vmatpush1.msra.mxu0 0.0
    %971 = vmatprep.subr.mxu0 0.0
    %972 = vmatpush1.msra.mxu0 0.0
    %973 = vmatprep.subr.mxu0 0.0
    %974 = vmatpush1.msra.mxu0 0.0
    %975 = vmatprep.subr.mxu0 0.0
    %976 = vmatpush1.msra.mxu0 0.0
    %977 = vmatprep.subr.mxu0 0.0
    %978 = vmatpush1.msra.mxu0 0.0
    %979 = vmatprep.subr.mxu0 0.0
    %980 = vmatpush1.msra.mxu0 0.0
    %981 = vmatprep.subr.mxu0 0.0
    %982 = vmatpush1.msra.mxu0 0.0
    %983 = vmatprep.subr.mxu0 0.0
    %984 = vmatpush1.msra.mxu0 0.0
    %985 = vmatprep.subr.mxu0 0.0
    %986 = vmatpush1.msra.mxu0 0.0
    %987 = vmatprep.subr.mxu0 0.0
    %988 = vmatpush1.msra.mxu0 0.0
    %989 = vmatprep.subr.mxu0 0.0
    %990 = vmatpush1.msra.mxu0 0.0
    %991 = vmatprep.subr.mxu0 0.0
    %992 = vmatpush1.msra.mxu0 0.0
    %993 = vmatprep.mubr.f32.mxu0 0.0
    %994 = vmatmul.mubr.f32.gmra.mrb[0].mxu0 %v927
    %v995 = vpop.f32.mrb[0].mxu0
    %v996 = vadd.f32 0.0, %v995
    %v997 = vpop.f32.mrb[0].mxu0
    %998 = vdwg.mxu0
    %v1001 = vunpack.c.l.s4 1966171168
    %v1002 = vunpack.c.0.s8 %v1001
    %v1003 = vlaneseq
    %v1004 = vshrl.u32 %v1003, 7
    %v1005 = vsub.s32 %v1002, %v1004
    %v1006 = vrot.slane %v996, %v1005
    %v1007 = vcombine.high %v1006, %v1006
    %v1009 = vunpack.c.l.s4 1966171168
    %v1010 = vunpack.c.0.s8 %v1009
    %v1011 = vlaneseq
    %v1012 = vshrl.u32 %v1011, 7
    %v1013 = vsub.s32 %v1010, %v1012
    %v1014 = vrot.slane %v1006, %v1013
    %v1016 = vunpack.c.l.s4 1966171168
    %v1017 = vunpack.c.0.s8 %v1016
    %v1018 = vlaneseq
    %v1019 = vshrl.u32 %v1018, 7
    %v1020 = vsub.s32 %v1017, %v1019
    %v1021 = vrot.slane %v1007, %v1020
    %v1022 = vlaneseq
    %v1023 = vshrl.u32 %v1022, 7
    %v1024 = vsub.s32 0, %v1023
    %v1025 = vrot.slane %v1014, %v1024
    %v1026 = vlaneseq
    %v1027 = vshrl.u32 %v1026, 7
    %v1028 = vsub.s32 0, %v1027
    %v1029 = vrot.slane %v1021, %v1028
    %v1033 = vsel %vm213, %v912, 0
    %v1036 = vsel %vm213, %v913, 0
    %1038 = vmatprep.subr.mxu0 0.0
    %1039 = vmatpush1.msra.mxu0 %v914
    %1040 = vmatprep.subr.mxu0 0.0
    %1041 = vmatpush1.msra.mxu0 %v915
    %1042 = vmatprep.subr.mxu0 0.0
    %1043 = vmatpush1.msra.mxu0 %v916
    %1044 = vmatprep.subr.mxu0 0.0
    %1045 = vmatpush1.msra.mxu0 %v917
    %1046 = vmatprep.subr.mxu0 0.0
    %1047 = vmatpush1.msra.mxu0 0.0
    %1048 = vmatprep.subr.mxu0 0.0
    %1049 = vmatpush1.msra.mxu0 0.0
    %1050 = vmatprep.subr.mxu0 0.0
    %1051 = vmatpush1.msra.mxu0 0.0
    %1052 = vmatprep.subr.mxu0 0.0
    %1053 = vmatpush1.msra.mxu0 0.0
    %1054 = vmatprep.subr.mxu0 0.0
    %1055 = vmatpush1.msra.mxu0 0.0
    %1056 = vmatprep.subr.mxu0 0.0
    %1057 = vmatpush1.msra.mxu0 0.0
    %1058 = vmatprep.subr.mxu0 0.0
    %1059 = vmatpush1.msra.mxu0 0.0
    %1060 = vmatprep.subr.mxu0 0.0
    %1061 = vmatpush1.msra.mxu0 0.0
    %1062 = vmatprep.subr.mxu0 0.0
    %1063 = vmatpush1.msra.mxu0 0.0
    %1064 = vmatprep.subr.mxu0 0.0
    %1065 = vmatpush1.msra.mxu0 0.0
    %1066 = vmatprep.subr.mxu0 0.0
    %1067 = vmatpush1.msra.mxu0 0.0
    %1068 = vmatprep.subr.mxu0 0.0
    %1069 = vmatpush1.msra.mxu0 0.0
    %1070 = vmatprep.subr.mxu0 0.0
    %1071 = vmatpush1.msra.mxu0 0.0
    %1072 = vmatprep.subr.mxu0 0.0
    %1073 = vmatpush1.msra.mxu0 0.0
    %1074 = vmatprep.subr.mxu0 0.0
    %1075 = vmatpush1.msra.mxu0 0.0
    %1076 = vmatprep.subr.mxu0 0.0
    %1077 = vmatpush1.msra.mxu0 0.0
    %1078 = vmatprep.subr.mxu0 0.0
    %1079 = vmatpush1.msra.mxu0 0.0
    %1080 = vmatprep.subr.mxu0 0.0
    %1081 = vmatpush1.msra.mxu0 0.0
    %1082 = vmatprep.subr.mxu0 0.0
    %1083 = vmatpush1.msra.mxu0 0.0
    %1084 = vmatprep.subr.mxu0 0.0
    %1085 = vmatpush1.msra.mxu0 0.0
    %1086 = vmatprep.subr.mxu0 0.0
    %1087 = vmatpush1.msra.mxu0 0.0
    %1088 = vmatprep.subr.mxu0 0.0
    %1089 = vmatpush1.msra.mxu0 0.0
    %1090 = vmatprep.subr.mxu0 0.0
    %1091 = vmatpush1.msra.mxu0 0.0
    %1092 = vmatprep.subr.mxu0 0.0
    %1093 = vmatpush1.msra.mxu0 0.0
    %1094 = vmatprep.subr.mxu0 0.0
    %1095 = vmatpush1.msra.mxu0 0.0
    %1096 = vmatprep.subr.mxu0 0.0
    %1097 = vmatpush1.msra.mxu0 0.0
    %1098 = vmatprep.subr.mxu0 0.0
    %1099 = vmatpush1.msra.mxu0 0.0
    %1100 = vmatprep.subr.mxu0 0.0
    %1101 = vmatpush1.msra.mxu0 0.0
    %1102 = vmatprep.mubr.f32.mxu0 0.0
    %1103 = vmatmul.mubr.f32.gmra.mrb[0].mxu0 %v1033
    %v1104 = vpop.f32.mrb[0].mxu0
    %v1105 = vadd.f32 %v1025, %v1104
    %v1106 = vpop.f32.mrb[0].mxu0
    %1107 = vmatprep.mubr.f32.mxu0 0.0
    %1108 = vmatmul.mubr.f32.gmra.mrb[0].mxu0 %v1036
    %v1109 = vpop.f32.mrb[0].mxu0
    %v1110 = vadd.f32 %v1029, %v1109
    %v1111 = vpop.f32.mrb[0].mxu0
    %1112 = vdwg.mxu0
    %v1113 = vld [vmem:[%s2 + $0x5] sm:$0x1]
    %v1114 = vlaneseq
    %v1115 = vshrl.u32 %v1114, 7
    %v1116 = vsub.s32 0, %v1115
    %v1117 = vrot.slane %v1113, %v1116
    %v1118 = vadd.f32 %v1105, %v1117
    %v1119 = vadd.f32 %v1110, %v1117
    %v1120 = vmax.f32 %v1118, 0.0
    %v1121 = vmax.f32 %v1119, 0.0
    %v1122 = vld [vmem:[%s1 + $0x188] sm:$0xff]
    %v1123 = vld [vmem:[%s1 + $0x190] sm:$0xff]
    %v1124 = vld [vmem:[%s1 + $0x198] sm:$0xff]
    %v1125 = vld [vmem:[%s1 + $0x1a0] sm:$0xff]
    %v1126 = vld [vmem:[%s2 + $0x6] sm:$0x1]
    %v1127 = vlaneseq
    %v1128 = vshrl.u32 %v1127, 7
    %v1129 = vsub.s32 0, %v1128
    %v1130 = vrot.slane %v1126, %v1129
    %v1132 = vsel %vm213, %v1120, 0
    %v1135 = vsel %vm213, %v1121, 0
    %1137 = vmatprep.subr.mxu0 0.0
    %1138 = vmatpush1.msra.mxu0 %v1122
    %1139 = vmatprep.subr.mxu0 0.0
    %1140 = vmatpush1.msra.mxu0 %v1123
    %1141 = vmatprep.subr.mxu0 0.0
    %1142 = vmatpush1.msra.mxu0 %v1124
    %1143 = vmatprep.subr.mxu0 0.0
    %1144 = vmatpush1.msra.mxu0 %v1125
    %1145 = vmatprep.subr.mxu0 0.0
    %1146 = vmatpush1.msra.mxu0 0.0
    %1147 = vmatprep.subr.mxu0 0.0
    %1148 = vmatpush1.msra.mxu0 0.0
    %1149 = vmatprep.subr.mxu0 0.0
    %1150 = vmatpush1.msra.mxu0 0.0
    %1151 = vmatprep.subr.mxu0 0.0
    %1152 = vmatpush1.msra.mxu0 0.0
    %1153 = vmatprep.subr.mxu0 0.0
    %1154 = vmatpush1.msra.mxu0 0.0
    %1155 = vmatprep.subr.mxu0 0.0
    %1156 = vmatpush1.msra.mxu0 0.0
    %1157 = vmatprep.subr.mxu0 0.0
    %1158 = vmatpush1.msra.mxu0 0.0
    %1159 = vmatprep.subr.mxu0 0.0
    %1160 = vmatpush1.msra.mxu0 0.0
    %1161 = vmatprep.subr.mxu0 0.0
    %1162 = vmatpush1.msra.mxu0 0.0
    %1163 = vmatprep.subr.mxu0 0.0
    %1164 = vmatpush1.msra.mxu0 0.0
    %1165 = vmatprep.subr.mxu0 0.0
    %1166 = vmatpush1.msra.mxu0 0.0
    %1167 = vmatprep.subr.mxu0 0.0
    %1168 = vmatpush1.msra.mxu0 0.0
    %1169 = vmatprep.subr.mxu0 0.0
    %1170 = vmatpush1.msra.mxu0 0.0
    %1171 = vmatprep.subr.mxu0 0.0
    %1172 = vmatpush1.msra.mxu0 0.0
    %1173 = vmatprep.subr.mxu0 0.0
    %1174 = vmatpush1.msra.mxu0 0.0
    %1175 = vmatprep.subr.mxu0 0.0
    %1176 = vmatpush1.msra.mxu0 0.0
    %1177 = vmatprep.subr.mxu0 0.0
    %1178 = vmatpush1.msra.mxu0 0.0
    %1179 = vmatprep.subr.mxu0 0.0
    %1180 = vmatpush1.msra.mxu0 0.0
    %1181 = vmatprep.subr.mxu0 0.0
    %1182 = vmatpush1.msra.mxu0 0.0
    %1183 = vmatprep.subr.mxu0 0.0
    %1184 = vmatpush1.msra.mxu0 0.0
    %1185 = vmatprep.subr.mxu0 0.0
    %1186 = vmatpush1.msra.mxu0 0.0
    %1187 = vmatprep.subr.mxu0 0.0
    %1188 = vmatpush1.msra.mxu0 0.0
    %1189 = vmatprep.subr.mxu0 0.0
    %1190 = vmatpush1.msra.mxu0 0.0
    %1191 = vmatprep.subr.mxu0 0.0
    %1192 = vmatpush1.msra.mxu0 0.0
    %1193 = vmatprep.subr.mxu0 0.0
    %1194 = vmatpush1.msra.mxu0 0.0
    %1195 = vmatprep.subr.mxu0 0.0
    %1196 = vmatpush1.msra.mxu0 0.0
    %1197 = vmatprep.subr.mxu0 0.0
    %1198 = vmatpush1.msra.mxu0 0.0
    %1199 = vmatprep.subr.mxu0 0.0
    %1200 = vmatpush1.msra.mxu0 0.0
    %1201 = vmatprep.mubr.f32.mxu0 0.0
    %1202 = vmatmul.mubr.f32.gmra.mrb[0].mxu0 %v1132
    %v1203 = vpop.f32.mrb[0].mxu0
    %v1204 = vadd.f32 %v1130, %v1203
    %v1205 = vpop.f32.mrb[0].mxu0
    %1206 = vmatprep.mubr.f32.mxu0 0.0
    %1207 = vmatmul.mubr.f32.gmra.mrb[0].mxu0 %v1135
    %v1208 = vpop.f32.mrb[0].mxu0
    %v1209 = vadd.f32 %v1130, %v1208
    %v1210 = vpop.f32.mrb[0].mxu0
    %1211 = vdwg.mxu0
    %v1212 = vld [vmem:[%s1 + $0x1a8] sm:$0xff]
    %v1213 = vld [vmem:[%s1 + $0x1b0] sm:$0xff]
    %v1214 = vld [vmem:[%s1 + $0x1b8] sm:$0xff]
    %v1215 = vld [vmem:[%s1 + $0x1c0] sm:$0xff]
    %v1216 = vld [vmem:[%s1 + $0x1c8] sm:$0xff]
    %v1217 = vld [vmem:[%s1 + $0x1d0] sm:$0xff]
    %v1218 = vld [vmem:[%s1 + $0x1d8] sm:$0xff]
    %v1219 = vld [vmem:[%s1 + $0x1e0] sm:$0xff]
    %v1222 = vsel %vm412, %v911, %v904
    %v1223 = vsel %vm213, %v1222, 0
    %1225 = vmatprep.subr.mxu0 0.0
    %1226 = vmatpush1.msra.mxu0 %v1216
    %1227 = vmatprep.subr.mxu0 0.0
    %1228 = vmatpush1.msra.mxu0 %v1217
    %1229 = vmatprep.subr.mxu0 0.0
    %1230 = vmatpush1.msra.mxu0 %v1218
    %1231 = vmatprep.subr.mxu0 0.0
    %1232 = vmatpush1.msra.mxu0 %v1219
    %1233 = vmatprep.subr.mxu0 0.0
    %1234 = vmatpush1.msra.mxu0 0.0
    %1235 = vmatprep.subr.mxu0 0.0
    %1236 = vmatpush1.msra.mxu0 0.0
    %1237 = vmatprep.subr.mxu0 0.0
    %1238 = vmatpush1.msra.mxu0 0.0
    %1239 = vmatprep.subr.mxu0 0.0
    %1240 = vmatpush1.msra.mxu0 0.0
    %1241 = vmatprep.subr.mxu0 0.0
    %1242 = vmatpush1.msra.mxu0 0.0
    %1243 = vmatprep.subr.mxu0 0.0
    %1244 = vmatpush1.msra.mxu0 0.0
    %1245 = vmatprep.subr.mxu0 0.0
    %1246 = vmatpush1.msra.mxu0 0.0
    %1247 = vmatprep.subr.mxu0 0.0
    %1248 = vmatpush1.msra.mxu0 0.0
    %1249 = vmatprep.subr.mxu0 0.0
    %1250 = vmatpush1.msra.mxu0 0.0
    %1251 = vmatprep.subr.mxu0 0.0
    %1252 = vmatpush1.msra.mxu0 0.0
    %1253 = vmatprep.subr.mxu0 0.0
    %1254 = vmatpush1.msra.mxu0 0.0
    %1255 = vmatprep.subr.mxu0 0.0
    %1256 = vmatpush1.msra.mxu0 0.0
    %1257 = vmatprep.subr.mxu0 0.0
    %1258 = vmatpush1.msra.mxu0 0.0
    %1259 = vmatprep.subr.mxu0 0.0
    %1260 = vmatpush1.msra.mxu0 0.0
    %1261 = vmatprep.subr.mxu0 0.0
    %1262 = vmatpush1.msra.mxu0 0.0
    %1263 = vmatprep.subr.mxu0 0.0
    %1264 = vmatpush1.msra.mxu0 0.0
    %1265 = vmatprep.subr.mxu0 0.0
    %1266 = vmatpush1.msra.mxu0 0.0
    %1267 = vmatprep.subr.mxu0 0.0
    %1268 = vmatpush1.msra.mxu0 0.0
    %1269 = vmatprep.subr.mxu0 0.0
    %1270 = vmatpush1.msra.mxu0 0.0
    %1271 = vmatprep.subr.mxu0 0.0
    %1272 = vmatpush1.msra.mxu0 0.0
    %1273 = vmatprep.subr.mxu0 0.0
    %1274 = vmatpush1.msra.mxu0 0.0
    %1275 = vmatprep.subr.mxu0 0.0
    %1276 = vmatpush1.msra.mxu0 0.0
    %1277 = vmatprep.subr.mxu0 0.0
    %1278 = vmatpush1.msra.mxu0 0.0
    %1279 = vmatprep.subr.mxu0 0.0
    %1280 = vmatpush1.msra.mxu0 0.0
    %1281 = vmatprep.subr.mxu0 0.0
    %1282 = vmatpush1.msra.mxu0 0.0
    %1283 = vmatprep.subr.mxu0 0.0
    %1284 = vmatpush1.msra.mxu0 0.0
    %1285 = vmatprep.subr.mxu0 0.0
    %1286 = vmatpush1.msra.mxu0 0.0
    %1287 = vmatprep.subr.mxu0 0.0
    %1288 = vmatpush1.msra.mxu0 0.0
    %1289 = vmatprep.mubr.f32.mxu0 0.0
    %1290 = vmatmul.mubr.f32.gmra.mrb[0].mxu0 %v1223
    %v1291 = vpop.f32.mrb[0].mxu0
    %v1292 = vadd.f32 0.0, %v1291
    %v1293 = vpop.f32.mrb[0].mxu0
    %1294 = vdwg.mxu0
    %v1297 = vunpack.c.l.s4 1966171168
    %v1298 = vunpack.c.0.s8 %v1297
    %v1299 = vlaneseq
    %v1300 = vshrl.u32 %v1299, 7
    %v1301 = vsub.s32 %v1298, %v1300
    %v1302 = vrot.slane %v1292, %v1301
    %v1303 = vcombine.high %v1302, %v1302
    %v1305 = vunpack.c.l.s4 1966171168
    %v1306 = vunpack.c.0.s8 %v1305
    %v1307 = vlaneseq
    %v1308 = vshrl.u32 %v1307, 7
    %v1309 = vsub.s32 %v1306, %v1308
    %v1310 = vrot.slane %v1302, %v1309
    %v1312 = vunpack.c.l.s4 1966171168
    %v1313 = vunpack.c.0.s8 %v1312
    %v1314 = vlaneseq
    %v1315 = vshrl.u32 %v1314, 7
    %v1316 = vsub.s32 %v1313, %v1315
    %v1317 = vrot.slane %v1303, %v1316
    %v1318 = vlaneseq
    %v1319 = vshrl.u32 %v1318, 7
    %v1320 = vsub.s32 0, %v1319
    %v1321 = vrot.slane %v1310, %v1320
    %v1322 = vlaneseq
    %v1323 = vshrl.u32 %v1322, 7
    %v1324 = vsub.s32 0, %v1323
    %v1325 = vrot.slane %v1317, %v1324
    %v1329 = vsel %vm213, %v896, 0
    %v1332 = vsel %vm213, %v897, 0
    %1334 = vmatprep.subr.mxu0 0.0
    %1335 = vmatpush1.msra.mxu0 %v1212
    %1336 = vmatprep.subr.mxu0 0.0
    %1337 = vmatpush1.msra.mxu0 %v1213
    %1338 = vmatprep.subr.mxu0 0.0
    %1339 = vmatpush1.msra.mxu0 %v1214
    %1340 = vmatprep.subr.mxu0 0.0
    %1341 = vmatpush1.msra.mxu0 %v1215
    %1342 = vmatprep.subr.mxu0 0.0
    %1343 = vmatpush1.msra.mxu0 0.0
    %1344 = vmatprep.subr.mxu0 0.0
    %1345 = vmatpush1.msra.mxu0 0.0
    %1346 = vmatprep.subr.mxu0 0.0
    %1347 = vmatpush1.msra.mxu0 0.0
    %1348 = vmatprep.subr.mxu0 0.0
    %1349 = vmatpush1.msra.mxu0 0.0
    %1350 = vmatprep.subr.mxu0 0.0
    %1351 = vmatpush1.msra.mxu0 0.0
    %1352 = vmatprep.subr.mxu0 0.0
    %1353 = vmatpush1.msra.mxu0 0.0
    %1354 = vmatprep.subr.mxu0 0.0
    %1355 = vmatpush1.msra.mxu0 0.0
    %1356 = vmatprep.subr.mxu0 0.0
    %1357 = vmatpush1.msra.mxu0 0.0
    %1358 = vmatprep.subr.mxu0 0.0
    %1359 = vmatpush1.msra.mxu0 0.0
    %1360 = vmatprep.subr.mxu0 0.0
    %1361 = vmatpush1.msra.mxu0 0.0
    %1362 = vmatprep.subr.mxu0 0.0
    %1363 = vmatpush1.msra.mxu0 0.0
    %1364 = vmatprep.subr.mxu0 0.0
    %1365 = vmatpush1.msra.mxu0 0.0
    %1366 = vmatprep.subr.mxu0 0.0
    %1367 = vmatpush1.msra.mxu0 0.0
    %1368 = vmatprep.subr.mxu0 0.0
    %1369 = vmatpush1.msra.mxu0 0.0
    %1370 = vmatprep.subr.mxu0 0.0
    %1371 = vmatpush1.msra.mxu0 0.0
    %1372 = vmatprep.subr.mxu0 0.0
    %1373 = vmatpush1.msra.mxu0 0.0
    %1374 = vmatprep.subr.mxu0 0.0
    %1375 = vmatpush1.msra.mxu0 0.0
    %1376 = vmatprep.subr.mxu0 0.0
    %1377 = vmatpush1.msra.mxu0 0.0
    %1378 = vmatprep.subr.mxu0 0.0
    %1379 = vmatpush1.msra.mxu0 0.0
    %1380 = vmatprep.subr.mxu0 0.0
    %1381 = vmatpush1.msra.mxu0 0.0
    %1382 = vmatprep.subr.mxu0 0.0
    %1383 = vmatpush1.msra.mxu0 0.0
    %1384 = vmatprep.subr.mxu0 0.0
    %1385 = vmatpush1.msra.mxu0 0.0
    %1386 = vmatprep.subr.mxu0 0.0
    %1387 = vmatpush1.msra.mxu0 0.0
    %1388 = vmatprep.subr.mxu0 0.0
    %1389 = vmatpush1.msra.mxu0 0.0
    %1390 = vmatprep.subr.mxu0 0.0
    %1391 = vmatpush1.msra.mxu0 0.0
    %1392 = vmatprep.subr.mxu0 0.0
    %1393 = vmatpush1.msra.mxu0 0.0
    %1394 = vmatprep.subr.mxu0 0.0
    %1395 = vmatpush1.msra.mxu0 0.0
    %1396 = vmatprep.subr.mxu0 0.0
    %1397 = vmatpush1.msra.mxu0 0.0
    %1398 = vmatprep.mubr.f32.mxu0 0.0
    %1399 = vmatmul.mubr.f32.gmra.mrb[0].mxu0 %v1329
    %v1400 = vpop.f32.mrb[0].mxu0
    %v1401 = vadd.f32 %v1321, %v1400
    %v1402 = vpop.f32.mrb[0].mxu0
    %1403 = vmatprep.mubr.f32.mxu0 0.0
    %1404 = vmatmul.mubr.f32.gmra.mrb[0].mxu0 %v1332
    %v1405 = vpop.f32.mrb[0].mxu0
    %v1406 = vadd.f32 %v1325, %v1405
    %v1407 = vpop.f32.mrb[0].mxu0
    %1408 = vdwg.mxu0
    %v1409 = vadd.f32 %v1401, %v1204
    %v1410 = vadd.f32 %v1406, %v1209
    %v1411 = vsel %vm213, %v1409, -inf
    %v1412 = vrot.slane %v1411, 4
    %v1413 = vmax.f32 %v1411, %v1412
    %v1414 = vrot.slane %v1413, 2
    %v1415 = vmax.f32 %v1413, %v1414
    %v1416 = vrot.slane %v1415, 1
    %v1417 = vmax.f32 %v1415, %v1416
    %v1418 = vsel %vm213, %v1410, -inf
    %v1419 = vrot.slane %v1418, 4
    %v1420 = vmax.f32 %v1418, %v1419
    %v1421 = vrot.slane %v1420, 2
    %v1422 = vmax.f32 %v1420, %v1421
    %v1423 = vrot.slane %v1422, 1
    %v1424 = vmax.f32 %v1422, %v1423
    %v1425 = vmax.f32 %v1409, 0.0
    %v1426 = vmax.f32 %v1410, 0.0
    %v1427 = vld [vmem:[%s1 + $0x1e8] sm:$0xff]
    %v1428 = vld [vmem:[%s1 + $0x1f0] sm:$0xff]
    %v1429 = vld [vmem:[%s1 + $0x1f8] sm:$0xff]
    %v1430 = vld [vmem:[%s1 + $0x200] sm:$0xff]
    %v1431 = vmax.f32 %v1417, 0.0
    %v1432 = vmax.f32 %v1424, 0.0
    %v1433 = vld [vmem:[%s1 + $0x208] sm:$0xff]
    %v1434 = vld [vmem:[%s1 + $0x210] sm:$0xff]
    %v1435 = vld [vmem:[%s1 + $0x218] sm:$0xff]
    %v1436 = vld [vmem:[%s1 + $0x220] sm:$0xff]
    %v1439 = vsel %vm412, %v1432, %v1431
    %v1440 = vsel %vm213, %v1439, 0
    %1442 = vmatprep.subr.mxu0 0.0
    %1443 = vmatpush1.msra.mxu0 %v1433
    %1444 = vmatprep.subr.mxu0 0.0
    %1445 = vmatpush1.msra.mxu0 %v1434
    %1446 = vmatprep.subr.mxu0 0.0
    %1447 = vmatpush1.msra.mxu0 %v1435
    %1448 = vmatprep.subr.mxu0 0.0
    %1449 = vmatpush1.msra.mxu0 %v1436
    %1450 = vmatprep.subr.mxu0 0.0
    %1451 = vmatpush1.msra.mxu0 0.0
    %1452 = vmatprep.subr.mxu0 0.0
    %1453 = vmatpush1.msra.mxu0 0.0
    %1454 = vmatprep.subr.mxu0 0.0
    %1455 = vmatpush1.msra.mxu0 0.0
    %1456 = vmatprep.subr.mxu0 0.0
    %1457 = vmatpush1.msra.mxu0 0.0
    %1458 = vmatprep.subr.mxu0 0.0
    %1459 = vmatpush1.msra.mxu0 0.0
    %1460 = vmatprep.subr.mxu0 0.0
    %1461 = vmatpush1.msra.mxu0 0.0
    %1462 = vmatprep.subr.mxu0 0.0
    %1463 = vmatpush1.msra.mxu0 0.0
    %1464 = vmatprep.subr.mxu0 0.0
    %1465 = vmatpush1.msra.mxu0 0.0
    %1466 = vmatprep.subr.mxu0 0.0
    %1467 = vmatpush1.msra.mxu0 0.0
    %1468 = vmatprep.subr.mxu0 0.0
    %1469 = vmatpush1.msra.mxu0 0.0
    %1470 = vmatprep.subr.mxu0 0.0
    %1471 = vmatpush1.msra.mxu0 0.0
    %1472 = vmatprep.subr.mxu0 0.0
    %1473 = vmatpush1.msra.mxu0 0.0
    %1474 = vmatprep.subr.mxu0 0.0
    %1475 = vmatpush1.msra.mxu0 0.0
    %1476 = vmatprep.subr.mxu0 0.0
    %1477 = vmatpush1.msra.mxu0 0.0
    %1478 = vmatprep.subr.mxu0 0.0
    %1479 = vmatpush1.msra.mxu0 0.0
    %1480 = vmatprep.subr.mxu0 0.0
    %1481 = vmatpush1.msra.mxu0 0.0
    %1482 = vmatprep.subr.mxu0 0.0
    %1483 = vmatpush1.msra.mxu0 0.0
    %1484 = vmatprep.subr.mxu0 0.0
    %1485 = vmatpush1.msra.mxu0 0.0
    %1486 = vmatprep.subr.mxu0 0.0
    %1487 = vmatpush1.msra.mxu0 0.0
    %1488 = vmatprep.subr.mxu0 0.0
    %1489 = vmatpush1.msra.mxu0 0.0
    %1490 = vmatprep.subr.mxu0 0.0
    %1491 = vmatpush1.msra.mxu0 0.0
    %1492 = vmatprep.subr.mxu0 0.0
    %1493 = vmatpush1.msra.mxu0 0.0
    %1494 = vmatprep.subr.mxu0 0.0
    %1495 = vmatpush1.msra.mxu0 0.0
    %1496 = vmatprep.subr.mxu0 0.0
    %1497 = vmatpush1.msra.mxu0 0.0
    %1498 = vmatprep.subr.mxu0 0.0
    %1499 = vmatpush1.msra.mxu0 0.0
    %1500 = vmatprep.subr.mxu0 0.0
    %1501 = vmatpush1.msra.mxu0 0.0
    %1502 = vmatprep.subr.mxu0 0.0
    %1503 = vmatpush1.msra.mxu0 0.0
    %1504 = vmatprep.subr.mxu0 0.0
    %1505 = vmatpush1.msra.mxu0 0.0
    %1506 = vmatprep.mubr.f32.mxu0 0.0
    %1507 = vmatmul.mubr.f32.gmra.mrb[0].mxu0 %v1440
    %v1508 = vpop.f32.mrb[0].mxu0
    %v1509 = vadd.f32 0.0, %v1508
    %v1510 = vpop.f32.mrb[0].mxu0
    %1511 = vdwg.mxu0
    %v1514 = vunpack.c.l.s4 1966171168
    %v1515 = vunpack.c.0.s8 %v1514
    %v1516 = vlaneseq
    %v1517 = vshrl.u32 %v1516, 7
    %v1518 = vsub.s32 %v1515, %v1517
    %v1519 = vrot.slane %v1509, %v1518
    %v1520 = vcombine.high %v1519, %v1519
    %v1522 = vunpack.c.l.s4 1966171168
    %v1523 = vunpack.c.0.s8 %v1522
    %v1524 = vlaneseq
    %v1525 = vshrl.u32 %v1524, 7
    %v1526 = vsub.s32 %v1523, %v1525
    %v1527 = vrot.slane %v1519, %v1526
    %v1529 = vunpack.c.l.s4 1966171168
    %v1530 = vunpack.c.0.s8 %v1529
    %v1531 = vlaneseq
    %v1532 = vshrl.u32 %v1531, 7
    %v1533 = vsub.s32 %v1530, %v1532
    %v1534 = vrot.slane %v1520, %v1533
    %v1535 = vlaneseq
    %v1536 = vshrl.u32 %v1535, 7
    %v1537 = vsub.s32 0, %v1536
    %v1538 = vrot.slane %v1527, %v1537
    %v1539 = vlaneseq
    %v1540 = vshrl.u32 %v1539, 7
    %v1541 = vsub.s32 0, %v1540
    %v1542 = vrot.slane %v1534, %v1541
    %v1546 = vsel %vm213, %v1425, 0
    %v1549 = vsel %vm213, %v1426, 0
    %1551 = vmatprep.subr.mxu0 0.0
    %1552 = vmatpush1.msra.mxu0 %v1427
    %1553 = vmatprep.subr.mxu0 0.0
    %1554 = vmatpush1.msra.mxu0 %v1428
    %1555 = vmatprep.subr.mxu0 0.0
    %1556 = vmatpush1.msra.mxu0 %v1429
    %1557 = vmatprep.subr.mxu0 0.0
    %1558 = vmatpush1.msra.mxu0 %v1430
    %1559 = vmatprep.subr.mxu0 0.0
    %1560 = vmatpush1.msra.mxu0 0.0
    %1561 = vmatprep.subr.mxu0 0.0
    %1562 = vmatpush1.msra.mxu0 0.0
    %1563 = vmatprep.subr.mxu0 0.0
    %1564 = vmatpush1.msra.mxu0 0.0
    %1565 = vmatprep.subr.mxu0 0.0
    %1566 = vmatpush1.msra.mxu0 0.0
    %1567 = vmatprep.subr.mxu0 0.0
    %1568 = vmatpush1.msra.mxu0 0.0
    %1569 = vmatprep.subr.mxu0 0.0
    %1570 = vmatpush1.msra.mxu0 0.0
    %1571 = vmatprep.subr.mxu0 0.0
    %1572 = vmatpush1.msra.mxu0 0.0
    %1573 = vmatprep.subr.mxu0 0.0
    %1574 = vmatpush1.msra.mxu0 0.0
    %1575 = vmatprep.subr.mxu0 0.0
    %1576 = vmatpush1.msra.mxu0 0.0
    %1577 = vmatprep.subr.mxu0 0.0
    %1578 = vmatpush1.msra.mxu0 0.0
    %1579 = vmatprep.subr.mxu0 0.0
    %1580 = vmatpush1.msra.mxu0 0.0
    %1581 = vmatprep.subr.mxu0 0.0
    %1582 = vmatpush1.msra.mxu0 0.0
    %1583 = vmatprep.subr.mxu0 0.0
    %1584 = vmatpush1.msra.mxu0 0.0
    %1585 = vmatprep.subr.mxu0 0.0
    %1586 = vmatpush1.msra.mxu0 0.0
    %1587 = vmatprep.subr.mxu0 0.0
    %1588 = vmatpush1.msra.mxu0 0.0
    %1589 = vmatprep.subr.mxu0 0.0
    %1590 = vmatpush1.msra.mxu0 0.0
    %1591 = vmatprep.subr.mxu0 0.0
    %1592 = vmatpush1.msra.mxu0 0.0
    %1593 = vmatprep.subr.mxu0 0.0
    %1594 = vmatpush1.msra.mxu0 0.0
    %1595 = vmatprep.subr.mxu0 0.0
    %1596 = vmatpush1.msra.mxu0 0.0
    %1597 = vmatprep.subr.mxu0 0.0
    %1598 = vmatpush1.msra.mxu0 0.0
    %1599 = vmatprep.subr.mxu0 0.0
    %1600 = vmatpush1.msra.mxu0 0.0
    %1601 = vmatprep.subr.mxu0 0.0
    %1602 = vmatpush1.msra.mxu0 0.0
    %1603 = vmatprep.subr.mxu0 0.0
    %1604 = vmatpush1.msra.mxu0 0.0
    %1605 = vmatprep.subr.mxu0 0.0
    %1606 = vmatpush1.msra.mxu0 0.0
    %1607 = vmatprep.subr.mxu0 0.0
    %1608 = vmatpush1.msra.mxu0 0.0
    %1609 = vmatprep.subr.mxu0 0.0
    %1610 = vmatpush1.msra.mxu0 0.0
    %1611 = vmatprep.subr.mxu0 0.0
    %1612 = vmatpush1.msra.mxu0 0.0
    %1613 = vmatprep.subr.mxu0 0.0
    %1614 = vmatpush1.msra.mxu0 0.0
    %1615 = vmatprep.mubr.f32.mxu0 0.0
    %1616 = vmatmul.mubr.f32.gmra.mrb[0].mxu0 %v1546
    %v1617 = vpop.f32.mrb[0].mxu0
    %v1618 = vadd.f32 %v1538, %v1617
    %v1619 = vpop.f32.mrb[0].mxu0
    %1620 = vmatprep.mubr.f32.mxu0 0.0
    %1621 = vmatmul.mubr.f32.gmra.mrb[0].mxu0 %v1549
    %v1622 = vpop.f32.mrb[0].mxu0
    %v1623 = vadd.f32 %v1542, %v1622
    %v1624 = vpop.f32.mrb[0].mxu0
    %1625 = vdwg.mxu0
    %v1626 = vld [vmem:[%s2 + $0x7] sm:$0x1]
    %v1627 = vlaneseq
    %v1628 = vshrl.u32 %v1627, 7
    %v1629 = vsub.s32 0, %v1628
    %v1630 = vrot.slane %v1626, %v1629
    %v1631 = vadd.f32 %v1618, %v1630
    %v1632 = vadd.f32 %v1623, %v1630
    %v1633 = vmax.f32 %v1631, 0.0
    %v1634 = vmax.f32 %v1632, 0.0
    %v1635 = vld [vmem:[%s1 + $0x228] sm:$0xff]
    %v1636 = vld [vmem:[%s1 + $0x230] sm:$0xff]
    %v1637 = vld [vmem:[%s1 + $0x238] sm:$0xff]
    %v1638 = vld [vmem:[%s1 + $0x240] sm:$0xff]
    %v1639 = vld [vmem:[%s2 + $0x8] sm:$0x1]
    %v1640 = vlaneseq
    %v1641 = vshrl.u32 %v1640, 7
    %v1642 = vsub.s32 0, %v1641
    %v1643 = vrot.slane %v1639, %v1642
    %v1645 = vsel %vm213, %v1633, 0
    %v1648 = vsel %vm213, %v1634, 0
    %1650 = vmatprep.subr.mxu0 0.0
    %1651 = vmatpush1.msra.mxu0 %v1635
    %1652 = vmatprep.subr.mxu0 0.0
    %1653 = vmatpush1.msra.mxu0 %v1636
    %1654 = vmatprep.subr.mxu0 0.0
    %1655 = vmatpush1.msra.mxu0 %v1637
    %1656 = vmatprep.subr.mxu0 0.0
    %1657 = vmatpush1.msra.mxu0 %v1638
    %1658 = vmatprep.subr.mxu0 0.0
    %1659 = vmatpush1.msra.mxu0 0.0
    %1660 = vmatprep.subr.mxu0 0.0
    %1661 = vmatpush1.msra.mxu0 0.0
    %1662 = vmatprep.subr.mxu0 0.0
    %1663 = vmatpush1.msra.mxu0 0.0
    %1664 = vmatprep.subr.mxu0 0.0
    %1665 = vmatpush1.msra.mxu0 0.0
    %1666 = vmatprep.subr.mxu0 0.0
    %1667 = vmatpush1.msra.mxu0 0.0
    %1668 = vmatprep.subr.mxu0 0.0
    %1669 = vmatpush1.msra.mxu0 0.0
    %1670 = vmatprep.subr.mxu0 0.0
    %1671 = vmatpush1.msra.mxu0 0.0
    %1672 = vmatprep.subr.mxu0 0.0
    %1673 = vmatpush1.msra.mxu0 0.0
    %1674 = vmatprep.subr.mxu0 0.0
    %1675 = vmatpush1.msra.mxu0 0.0
    %1676 = vmatprep.subr.mxu0 0.0
    %1677 = vmatpush1.msra.mxu0 0.0
    %1678 = vmatprep.subr.mxu0 0.0
    %1679 = vmatpush1.msra.mxu0 0.0
    %1680 = vmatprep.subr.mxu0 0.0
    %1681 = vmatpush1.msra.mxu0 0.0
    %1682 = vmatprep.subr.mxu0 0.0
    %1683 = vmatpush1.msra.mxu0 0.0
    %1684 = vmatprep.subr.mxu0 0.0
    %1685 = vmatpush1.msra.mxu0 0.0
    %1686 = vmatprep.subr.mxu0 0.0
    %1687 = vmatpush1.msra.mxu0 0.0
    %1688 = vmatprep.subr.mxu0 0.0
    %1689 = vmatpush1.msra.mxu0 0.0
    %1690 = vmatprep.subr.mxu0 0.0
    %1691 = vmatpush1.msra.mxu0 0.0
    %1692 = vmatprep.subr.mxu0 0.0
    %1693 = vmatpush1.msra.mxu0 0.0
    %1694 = vmatprep.subr.mxu0 0.0
    %1695 = vmatpush1.msra.mxu0 0.0
    %1696 = vmatprep.subr.mxu0 0.0
    %1697 = vmatpush1.msra.mxu0 0.0
    %1698 = vmatprep.subr.mxu0 0.0
    %1699 = vmatpush1.msra.mxu0 0.0
    %1700 = vmatprep.subr.mxu0 0.0
    %1701 = vmatpush1.msra.mxu0 0.0
    %1702 = vmatprep.subr.mxu0 0.0
    %1703 = vmatpush1.msra.mxu0 0.0
    %1704 = vmatprep.subr.mxu0 0.0
    %1705 = vmatpush1.msra.mxu0 0.0
    %1706 = vmatprep.subr.mxu0 0.0
    %1707 = vmatpush1.msra.mxu0 0.0
    %1708 = vmatprep.subr.mxu0 0.0
    %1709 = vmatpush1.msra.mxu0 0.0
    %1710 = vmatprep.subr.mxu0 0.0
    %1711 = vmatpush1.msra.mxu0 0.0
    %1712 = vmatprep.subr.mxu0 0.0
    %1713 = vmatpush1.msra.mxu0 0.0
    %1714 = vmatprep.mubr.f32.mxu0 0.0
    %1715 = vmatmul.mubr.f32.gmra.mrb[0].mxu0 %v1645
    %v1716 = vpop.f32.mrb[0].mxu0
    %v1717 = vadd.f32 %v1643, %v1716
    %v1718 = vpop.f32.mrb[0].mxu0
    %1719 = vmatprep.mubr.f32.mxu0 0.0
    %1720 = vmatmul.mubr.f32.gmra.mrb[0].mxu0 %v1648
    %v1721 = vpop.f32.mrb[0].mxu0
    %v1722 = vadd.f32 %v1643, %v1721
    %v1723 = vpop.f32.mrb[0].mxu0
    %1724 = vdwg.mxu0
    %v1725 = vld [vmem:[%s1 + $0x248] sm:$0xff]
    %v1726 = vld [vmem:[%s1 + $0x250] sm:$0xff]
    %v1727 = vld [vmem:[%s1 + $0x258] sm:$0xff]
    %v1728 = vld [vmem:[%s1 + $0x260] sm:$0xff]
    %v1729 = vld [vmem:[%s1 + $0x268] sm:$0xff]
    %v1730 = vld [vmem:[%s1 + $0x270] sm:$0xff]
    %v1731 = vld [vmem:[%s1 + $0x278] sm:$0xff]
    %v1732 = vld [vmem:[%s1 + $0x280] sm:$0xff]
    %v1735 = vsel %vm412, %v1424, %v1417
    %v1736 = vsel %vm213, %v1735, 0
    %1738 = vmatprep.subr.mxu0 0.0
    %1739 = vmatpush1.msra.mxu0 %v1729
    %1740 = vmatprep.subr.mxu0 0.0
    %1741 = vmatpush1.msra.mxu0 %v1730
    %1742 = vmatprep.subr.mxu0 0.0
    %1743 = vmatpush1.msra.mxu0 %v1731
    %1744 = vmatprep.subr.mxu0 0.0
    %1745 = vmatpush1.msra.mxu0 %v1732
    %1746 = vmatprep.subr.mxu0 0.0
    %1747 = vmatpush1.msra.mxu0 0.0
    %1748 = vmatprep.subr.mxu0 0.0
    %1749 = vmatpush1.msra.mxu0 0.0
    %1750 = vmatprep.subr.mxu0 0.0
    %1751 = vmatpush1.msra.mxu0 0.0
    %1752 = vmatprep.subr.mxu0 0.0
    %1753 = vmatpush1.msra.mxu0 0.0
    %1754 = vmatprep.subr.mxu0 0.0
    %1755 = vmatpush1.msra.mxu0 0.0
    %1756 = vmatprep.subr.mxu0 0.0
    %1757 = vmatpush1.msra.mxu0 0.0
    %1758 = vmatprep.subr.mxu0 0.0
    %1759 = vmatpush1.msra.mxu0 0.0
    %1760 = vmatprep.subr.mxu0 0.0
    %1761 = vmatpush1.msra.mxu0 0.0
    %1762 = vmatprep.subr.mxu0 0.0
    %1763 = vmatpush1.msra.mxu0 0.0
    %1764 = vmatprep.subr.mxu0 0.0
    %1765 = vmatpush1.msra.mxu0 0.0
    %1766 = vmatprep.subr.mxu0 0.0
    %1767 = vmatpush1.msra.mxu0 0.0
    %1768 = vmatprep.subr.mxu0 0.0
    %1769 = vmatpush1.msra.mxu0 0.0
    %1770 = vmatprep.subr.mxu0 0.0
    %1771 = vmatpush1.msra.mxu0 0.0
    %1772 = vmatprep.subr.mxu0 0.0
    %1773 = vmatpush1.msra.mxu0 0.0
    %1774 = vmatprep.subr.mxu0 0.0
    %1775 = vmatpush1.msra.mxu0 0.0
    %1776 = vmatprep.subr.mxu0 0.0
    %1777 = vmatpush1.msra.mxu0 0.0
    %1778 = vmatprep.subr.mxu0 0.0
    %1779 = vmatpush1.msra.mxu0 0.0
    %1780 = vmatprep.subr.mxu0 0.0
    %1781 = vmatpush1.msra.mxu0 0.0
    %1782 = vmatprep.subr.mxu0 0.0
    %1783 = vmatpush1.msra.mxu0 0.0
    %1784 = vmatprep.subr.mxu0 0.0
    %1785 = vmatpush1.msra.mxu0 0.0
    %1786 = vmatprep.subr.mxu0 0.0
    %1787 = vmatpush1.msra.mxu0 0.0
    %1788 = vmatprep.subr.mxu0 0.0
    %1789 = vmatpush1.msra.mxu0 0.0
    %1790 = vmatprep.subr.mxu0 0.0
    %1791 = vmatpush1.msra.mxu0 0.0
    %1792 = vmatprep.subr.mxu0 0.0
    %1793 = vmatpush1.msra.mxu0 0.0
    %1794 = vmatprep.subr.mxu0 0.0
    %1795 = vmatpush1.msra.mxu0 0.0
    %1796 = vmatprep.subr.mxu0 0.0
    %1797 = vmatpush1.msra.mxu0 0.0
    %1798 = vmatprep.subr.mxu0 0.0
    %1799 = vmatpush1.msra.mxu0 0.0
    %1800 = vmatprep.subr.mxu0 0.0
    %1801 = vmatpush1.msra.mxu0 0.0
    %1802 = vmatprep.mubr.f32.mxu0 0.0
    %1803 = vmatmul.mubr.f32.gmra.mrb[0].mxu0 %v1736
    %v1804 = vpop.f32.mrb[0].mxu0
    %v1805 = vadd.f32 0.0, %v1804
    %v1806 = vpop.f32.mrb[0].mxu0
    %1807 = vdwg.mxu0
    %v1810 = vunpack.c.l.s4 1966171168
    %v1811 = vunpack.c.0.s8 %v1810
    %v1812 = vlaneseq
    %v1813 = vshrl.u32 %v1812, 7
    %v1814 = vsub.s32 %v1811, %v1813
    %v1815 = vrot.slane %v1805, %v1814
    %v1816 = vcombine.high %v1815, %v1815
    %v1818 = vunpack.c.l.s4 1966171168
    %v1819 = vunpack.c.0.s8 %v1818
    %v1820 = vlaneseq
    %v1821 = vshrl.u32 %v1820, 7
    %v1822 = vsub.s32 %v1819, %v1821
    %v1823 = vrot.slane %v1815, %v1822
    %v1825 = vunpack.c.l.s4 1966171168
    %v1826 = vunpack.c.0.s8 %v1825
    %v1827 = vlaneseq
    %v1828 = vshrl.u32 %v1827, 7
    %v1829 = vsub.s32 %v1826, %v1828
    %v1830 = vrot.slane %v1816, %v1829
    %v1831 = vlaneseq
    %v1832 = vshrl.u32 %v1831, 7
    %v1833 = vsub.s32 0, %v1832
    %v1834 = vrot.slane %v1823, %v1833
    %v1835 = vlaneseq
    %v1836 = vshrl.u32 %v1835, 7
    %v1837 = vsub.s32 0, %v1836
    %v1838 = vrot.slane %v1830, %v1837
    %v1842 = vsel %vm213, %v1409, 0
    %v1845 = vsel %vm213, %v1410, 0
    %1847 = vmatprep.subr.mxu0 0.0
    %1848 = vmatpush1.msra.mxu0 %v1725
    %1849 = vmatprep.subr.mxu0 0.0
    %1850 = vmatpush1.msra.mxu0 %v1726
    %1851 = vmatprep.subr.mxu0 0.0
    %1852 = vmatpush1.msra.mxu0 %v1727
    %1853 = vmatprep.subr.mxu0 0.0
    %1854 = vmatpush1.msra.mxu0 %v1728
    %1855 = vmatprep.subr.mxu0 0.0
    %1856 = vmatpush1.msra.mxu0 0.0
    %1857 = vmatprep.subr.mxu0 0.0
    %1858 = vmatpush1.msra.mxu0 0.0
    %1859 = vmatprep.subr.mxu0 0.0
    %1860 = vmatpush1.msra.mxu0 0.0
    %1861 = vmatprep.subr.mxu0 0.0
    %1862 = vmatpush1.msra.mxu0 0.0
    %1863 = vmatprep.subr.mxu0 0.0
    %1864 = vmatpush1.msra.mxu0 0.0
    %1865 = vmatprep.subr.mxu0 0.0
    %1866 = vmatpush1.msra.mxu0 0.0
    %1867 = vmatprep.subr.mxu0 0.0
    %1868 = vmatpush1.msra.mxu0 0.0
    %1869 = vmatprep.subr.mxu0 0.0
    %1870 = vmatpush1.msra.mxu0 0.0
    %1871 = vmatprep.subr.mxu0 0.0
    %1872 = vmatpush1.msra.mxu0 0.0
    %1873 = vmatprep.subr.mxu0 0.0
    %1874 = vmatpush1.msra.mxu0 0.0
    %1875 = vmatprep.subr.mxu0 0.0
    %1876 = vmatpush1.msra.mxu0 0.0
    %1877 = vmatprep.subr.mxu0 0.0
    %1878 = vmatpush1.msra.mxu0 0.0
    %1879 = vmatprep.subr.mxu0 0.0
    %1880 = vmatpush1.msra.mxu0 0.0
    %1881 = vmatprep.subr.mxu0 0.0
    %1882 = vmatpush1.msra.mxu0 0.0
    %1883 = vmatprep.subr.mxu0 0.0
    %1884 = vmatpush1.msra.mxu0 0.0
    %1885 = vmatprep.subr.mxu0 0.0
    %1886 = vmatpush1.msra.mxu0 0.0
    %1887 = vmatprep.subr.mxu0 0.0
    %1888 = vmatpush1.msra.mxu0 0.0
    %1889 = vmatprep.subr.mxu0 0.0
    %1890 = vmatpush1.msra.mxu0 0.0
    %1891 = vmatprep.subr.mxu0 0.0
    %1892 = vmatpush1.msra.mxu0 0.0
    %1893 = vmatprep.subr.mxu0 0.0
    %1894 = vmatpush1.msra.mxu0 0.0
    %1895 = vmatprep.subr.mxu0 0.0
    %1896 = vmatpush1.msra.mxu0 0.0
    %1897 = vmatprep.subr.mxu0 0.0
    %1898 = vmatpush1.msra.mxu0 0.0
    %1899 = vmatprep.subr.mxu0 0.0
    %1900 = vmatpush1.msra.mxu0 0.0
    %1901 = vmatprep.subr.mxu0 0.0
    %1902 = vmatpush1.msra.mxu0 0.0
    %1903 = vmatprep.subr.mxu0 0.0
    %1904 = vmatpush1.msra.mxu0 0.0
    %1905 = vmatprep.subr.mxu0 0.0
    %1906 = vmatpush1.msra.mxu0 0.0
    %1907 = vmatprep.subr.mxu0 0.0
    %1908 = vmatpush1.msra.mxu0 0.0
    %1909 = vmatprep.subr.mxu0 0.0
    %1910 = vmatpush1.msra.mxu0 0.0
    %1911 = vmatprep.mubr.f32.mxu0 0.0
    %1912 = vmatmul.mubr.f32.gmra.mrb[0].mxu0 %v1842
    %v1913 = vpop.f32.mrb[0].mxu0
    %v1914 = vadd.f32 %v1834, %v1913
    %v1915 = vpop.f32.mrb[0].mxu0
    %1916 = vmatprep.mubr.f32.mxu0 0.0
    %1917 = vmatmul.mubr.f32.gmra.mrb[0].mxu0 %v1845
    %v1918 = vpop.f32.mrb[0].mxu0
    %v1919 = vadd.f32 %v1838, %v1918
    %v1920 = vpop.f32.mrb[0].mxu0
    %1921 = vdwg.mxu0
    %v1922 = vadd.f32 %v1914, %v1717
    %v1923 = vadd.f32 %v1919, %v1722
    %v1924 = vsel %vm213, %v1922, -inf
    %v1925 = vrot.slane %v1924, 4
    %v1926 = vmax.f32 %v1924, %v1925
    %v1927 = vrot.slane %v1926, 2
    %v1928 = vmax.f32 %v1926, %v1927
    %v1929 = vrot.slane %v1928, 1
    %v1930 = vmax.f32 %v1928, %v1929
    %v1931 = vsel %vm213, %v1923, -inf
    %v1932 = vrot.slane %v1931, 4
    %v1933 = vmax.f32 %v1931, %v1932
    %v1934 = vrot.slane %v1933, 2
    %v1935 = vmax.f32 %v1933, %v1934
    %v1936 = vrot.slane %v1935, 1
    %v1937 = vmax.f32 %v1935, %v1936
    %v1938 = vmax.f32 %v1922, 0.0
    %v1939 = vmax.f32 %v1923, 0.0
    %v1940 = vld [vmem:[%s1 + $0x288] sm:$0xff]
    %v1941 = vld [vmem:[%s1 + $0x290] sm:$0xff]
    %v1942 = vld [vmem:[%s1 + $0x298] sm:$0xff]
    %v1943 = vld [vmem:[%s1 + $0x2a0] sm:$0xff]
    %v1944 = vmax.f32 %v1930, 0.0
    %v1945 = vmax.f32 %v1937, 0.0
    %v1946 = vld [vmem:[%s1 + $0x2a8] sm:$0xff]
    %v1947 = vld [vmem:[%s1 + $0x2b0] sm:$0xff]
    %v1948 = vld [vmem:[%s1 + $0x2b8] sm:$0xff]
    %v1949 = vld [vmem:[%s1 + $0x2c0] sm:$0xff]
    %v1952 = vsel %vm412, %v1945, %v1944
    %v1953 = vsel %vm213, %v1952, 0
    %1955 = vmatprep.subr.mxu0 0.0
    %1956 = vmatpush1.msra.mxu0 %v1946
    %1957 = vmatprep.subr.mxu0 0.0
    %1958 = vmatpush1.msra.mxu0 %v1947
    %1959 = vmatprep.subr.mxu0 0.0
    %1960 = vmatpush1.msra.mxu0 %v1948
    %1961 = vmatprep.subr.mxu0 0.0
    %1962 = vmatpush1.msra.mxu0 %v1949
    %1963 = vmatprep.subr.mxu0 0.0
    %1964 = vmatpush1.msra.mxu0 0.0
    %1965 = vmatprep.subr.mxu0 0.0
    %1966 = vmatpush1.msra.mxu0 0.0
    %1967 = vmatprep.subr.mxu0 0.0
    %1968 = vmatpush1.msra.mxu0 0.0
    %1969 = vmatprep.subr.mxu0 0.0
    %1970 = vmatpush1.msra.mxu0 0.0
    %1971 = vmatprep.subr.mxu0 0.0
    %1972 = vmatpush1.msra.mxu0 0.0
    %1973 = vmatprep.subr.mxu0 0.0
    %1974 = vmatpush1.msra.mxu0 0.0
    %1975 = vmatprep.subr.mxu0 0.0
    %1976 = vmatpush1.msra.mxu0 0.0
    %1977 = vmatprep.subr.mxu0 0.0
    %1978 = vmatpush1.msra.mxu0 0.0
    %1979 = vmatprep.subr.mxu0 0.0
    %1980 = vmatpush1.msra.mxu0 0.0
    %1981 = vmatprep.subr.mxu0 0.0
    %1982 = vmatpush1.msra.mxu0 0.0
    %1983 = vmatprep.subr.mxu0 0.0
    %1984 = vmatpush1.msra.mxu0 0.0
    %1985 = vmatprep.subr.mxu0 0.0
    %1986 = vmatpush1.msra.mxu0 0.0
    %1987 = vmatprep.subr.mxu0 0.0
    %1988 = vmatpush1.msra.mxu0 0.0
    %1989 = vmatprep.subr.mxu0 0.0
    %1990 = vmatpush1.msra.mxu0 0.0
    %1991 = vmatprep.subr.mxu0 0.0
    %1992 = vmatpush1.msra.mxu0 0.0
    %1993 = vmatprep.subr.mxu0 0.0
    %1994 = vmatpush1.msra.mxu0 0.0
    %1995 = vmatprep.subr.mxu0 0.0
    %1996 = vmatpush1.msra.mxu0 0.0
    %1997 = vmatprep.subr.mxu0 0.0
    %1998 = vmatpush1.msra.mxu0 0.0
    %1999 = vmatprep.subr.mxu0 0.0
    %2000 = vmatpush1.msra.mxu0 0.0
    %2001 = vmatprep.subr.mxu0 0.0
    %2002 = vmatpush1.msra.mxu0 0.0
    %2003 = vmatprep.subr.mxu0 0.0
    %2004 = vmatpush1.msra.mxu0 0.0
    %2005 = vmatprep.subr.mxu0 0.0
    %2006 = vmatpush1.msra.mxu0 0.0
    %2007 = vmatprep.subr.mxu0 0.0
    %2008 = vmatpush1.msra.mxu0 0.0
    %2009 = vmatprep.subr.mxu0 0.0
    %2010 = vmatpush1.msra.mxu0 0.0
    %2011 = vmatprep.subr.mxu0 0.0
    %2012 = vmatpush1.msra.mxu0 0.0
    %2013 = vmatprep.subr.mxu0 0.0
    %2014 = vmatpush1.msra.mxu0 0.0
    %2015 = vmatprep.subr.mxu0 0.0
    %2016 = vmatpush1.msra.mxu0 0.0
    %2017 = vmatprep.subr.mxu0 0.0
    %2018 = vmatpush1.msra.mxu0 0.0
    %2019 = vmatprep.mubr.f32.mxu0 0.0
    %2020 = vmatmul.mubr.f32.gmra.mrb[0].mxu0 %v1953
    %v2021 = vpop.f32.mrb[0].mxu0
    %v2022 = vadd.f32 0.0, %v2021
    %v2023 = vpop.f32.mrb[0].mxu0
    %2024 = vdwg.mxu0
    %v2027 = vunpack.c.l.s4 1966171168
    %v2028 = vunpack.c.0.s8 %v2027
    %v2029 = vlaneseq
    %v2030 = vshrl.u32 %v2029, 7
    %v2031 = vsub.s32 %v2028, %v2030
    %v2032 = vrot.slane %v2022, %v2031
    %v2033 = vcombine.high %v2032, %v2032
    %v2035 = vunpack.c.l.s4 1966171168
    %v2036 = vunpack.c.0.s8 %v2035
    %v2037 = vlaneseq
    %v2038 = vshrl.u32 %v2037, 7
    %v2039 = vsub.s32 %v2036, %v2038
    %v2040 = vrot.slane %v2032, %v2039
    %v2042 = vunpack.c.l.s4 1966171168
    %v2043 = vunpack.c.0.s8 %v2042
    %v2044 = vlaneseq
    %v2045 = vshrl.u32 %v2044, 7
    %v2046 = vsub.s32 %v2043, %v2045
    %v2047 = vrot.slane %v2033, %v2046
    %v2048 = vlaneseq
    %v2049 = vshrl.u32 %v2048, 7
    %v2050 = vsub.s32 0, %v2049
    %v2051 = vrot.slane %v2040, %v2050
    %v2052 = vlaneseq
    %v2053 = vshrl.u32 %v2052, 7
    %v2054 = vsub.s32 0, %v2053
    %v2055 = vrot.slane %v2047, %v2054
    %v2059 = vsel %vm213, %v1938, 0
    %v2062 = vsel %vm213, %v1939, 0
    %2064 = vmatprep.subr.mxu0 0.0
    %2065 = vmatpush1.msra.mxu0 %v1940
    %2066 = vmatprep.subr.mxu0 0.0
    %2067 = vmatpush1.msra.mxu0 %v1941
    %2068 = vmatprep.subr.mxu0 0.0
    %2069 = vmatpush1.msra.mxu0 %v1942
    %2070 = vmatprep.subr.mxu0 0.0
    %2071 = vmatpush1.msra.mxu0 %v1943
    %2072 = vmatprep.subr.mxu0 0.0
    %2073 = vmatpush1.msra.mxu0 0.0
    %2074 = vmatprep.subr.mxu0 0.0
    %2075 = vmatpush1.msra.mxu0 0.0
    %2076 = vmatprep.subr.mxu0 0.0
    %2077 = vmatpush1.msra.mxu0 0.0
    %2078 = vmatprep.subr.mxu0 0.0
    %2079 = vmatpush1.msra.mxu0 0.0
    %2080 = vmatprep.subr.mxu0 0.0
    %2081 = vmatpush1.msra.mxu0 0.0
    %2082 = vmatprep.subr.mxu0 0.0
    %2083 = vmatpush1.msra.mxu0 0.0
    %2084 = vmatprep.subr.mxu0 0.0
    %2085 = vmatpush1.msra.mxu0 0.0
    %2086 = vmatprep.subr.mxu0 0.0
    %2087 = vmatpush1.msra.mxu0 0.0
    %2088 = vmatprep.subr.mxu0 0.0
    %2089 = vmatpush1.msra.mxu0 0.0
    %2090 = vmatprep.subr.mxu0 0.0
    %2091 = vmatpush1.msra.mxu0 0.0
    %2092 = vmatprep.subr.mxu0 0.0
    %2093 = vmatpush1.msra.mxu0 0.0
    %2094 = vmatprep.subr.mxu0 0.0
    %2095 = vmatpush1.msra.mxu0 0.0
    %2096 = vmatprep.subr.mxu0 0.0
    %2097 = vmatpush1.msra.mxu0 0.0
    %2098 = vmatprep.subr.mxu0 0.0
    %2099 = vmatpush1.msra.mxu0 0.0
    %2100 = vmatprep.subr.mxu0 0.0
    %2101 = vmatpush1.msra.mxu0 0.0
    %2102 = vmatprep.subr.mxu0 0.0
    %2103 = vmatpush1.msra.mxu0 0.0
    %2104 = vmatprep.subr.mxu0 0.0
    %2105 = vmatpush1.msra.mxu0 0.0
    %2106 = vmatprep.subr.mxu0 0.0
    %2107 = vmatpush1.msra.mxu0 0.0
    %2108 = vmatprep.subr.mxu0 0.0
    %2109 = vmatpush1.msra.mxu0 0.0
    %2110 = vmatprep.subr.mxu0 0.0
    %2111 = vmatpush1.msra.mxu0 0.0
    %2112 = vmatprep.subr.mxu0 0.0
    %2113 = vmatpush1.msra.mxu0 0.0
    %2114 = vmatprep.subr.mxu0 0.0
    %2115 = vmatpush1.msra.mxu0 0.0
    %2116 = vmatprep.subr.mxu0 0.0
    %2117 = vmatpush1.msra.mxu0 0.0
    %2118 = vmatprep.subr.mxu0 0.0
    %2119 = vmatpush1.msra.mxu0 0.0
    %2120 = vmatprep.subr.mxu0 0.0
    %2121 = vmatpush1.msra.mxu0 0.0
    %2122 = vmatprep.subr.mxu0 0.0
    %2123 = vmatpush1.msra.mxu0 0.0
    %2124 = vmatprep.subr.mxu0 0.0
    %2125 = vmatpush1.msra.mxu0 0.0
    %2126 = vmatprep.subr.mxu0 0.0
    %2127 = vmatpush1.msra.mxu0 0.0
    %2128 = vmatprep.mubr.f32.mxu0 0.0
    %2129 = vmatmul.mubr.f32.gmra.mrb[0].mxu0 %v2059
    %v2130 = vpop.f32.mrb[0].mxu0
    %v2131 = vadd.f32 %v2051, %v2130
    %v2132 = vpop.f32.mrb[0].mxu0
    %2133 = vmatprep.mubr.f32.mxu0 0.0
    %2134 = vmatmul.mubr.f32.gmra.mrb[0].mxu0 %v2062
    %v2135 = vpop.f32.mrb[0].mxu0
    %v2136 = vadd.f32 %v2055, %v2135
    %v2137 = vpop.f32.mrb[0].mxu0
    %2138 = vdwg.mxu0
    %v2139 = vld [vmem:[%s2 + $0x9] sm:$0x1]
    %v2140 = vlaneseq
    %v2141 = vshrl.u32 %v2140, 7
    %v2142 = vsub.s32 0, %v2141
    %v2143 = vrot.slane %v2139, %v2142
    %v2144 = vadd.f32 %v2131, %v2143
    %v2145 = vadd.f32 %v2136, %v2143
    %v2146 = vmax.f32 %v2144, 0.0
    %v2147 = vmax.f32 %v2145, 0.0
    %v2148 = vld [vmem:[%s1 + $0x2c8] sm:$0xff]
    %v2149 = vld [vmem:[%s1 + $0x2d0] sm:$0xff]
    %v2150 = vld [vmem:[%s1 + $0x2d8] sm:$0xff]
    %v2151 = vld [vmem:[%s1 + $0x2e0] sm:$0xff]
    %v2152 = vld [vmem:[%s2 + $0xa] sm:$0x1]
    %v2153 = vlaneseq
    %v2154 = vshrl.u32 %v2153, 7
    %v2155 = vsub.s32 0, %v2154
    %v2156 = vrot.slane %v2152, %v2155
    %v2158 = vsel %vm213, %v2146, 0
    %v2161 = vsel %vm213, %v2147, 0
    %2163 = vmatprep.subr.mxu0 0.0
    %2164 = vmatpush1.msra.mxu0 %v2148
    %2165 = vmatprep.subr.mxu0 0.0
    %2166 = vmatpush1.msra.mxu0 %v2149
    %2167 = vmatprep.subr.mxu0 0.0
    %2168 = vmatpush1.msra.mxu0 %v2150
    %2169 = vmatprep.subr.mxu0 0.0
    %2170 = vmatpush1.msra.mxu0 %v2151
    %2171 = vmatprep.subr.mxu0 0.0
    %2172 = vmatpush1.msra.mxu0 0.0
    %2173 = vmatprep.subr.mxu0 0.0
    %2174 = vmatpush1.msra.mxu0 0.0
    %2175 = vmatprep.subr.mxu0 0.0
    %2176 = vmatpush1.msra.mxu0 0.0
    %2177 = vmatprep.subr.mxu0 0.0
    %2178 = vmatpush1.msra.mxu0 0.0
    %2179 = vmatprep.subr.mxu0 0.0
    %2180 = vmatpush1.msra.mxu0 0.0
    %2181 = vmatprep.subr.mxu0 0.0
    %2182 = vmatpush1.msra.mxu0 0.0
    %2183 = vmatprep.subr.mxu0 0.0
    %2184 = vmatpush1.msra.mxu0 0.0
    %2185 = vmatprep.subr.mxu0 0.0
    %2186 = vmatpush1.msra.mxu0 0.0
    %2187 = vmatprep.subr.mxu0 0.0
    %2188 = vmatpush1.msra.mxu0 0.0
    %2189 = vmatprep.subr.mxu0 0.0
    %2190 = vmatpush1.msra.mxu0 0.0
    %2191 = vmatprep.subr.mxu0 0.0
    %2192 = vmatpush1.msra.mxu0 0.0
    %2193 = vmatprep.subr.mxu0 0.0
    %2194 = vmatpush1.msra.mxu0 0.0
    %2195 = vmatprep.subr.mxu0 0.0
    %2196 = vmatpush1.msra.mxu0 0.0
    %2197 = vmatprep.subr.mxu0 0.0
    %2198 = vmatpush1.msra.mxu0 0.0
    %2199 = vmatprep.subr.mxu0 0.0
    %2200 = vmatpush1.msra.mxu0 0.0
    %2201 = vmatprep.subr.mxu0 0.0
    %2202 = vmatpush1.msra.mxu0 0.0
    %2203 = vmatprep.subr.mxu0 0.0
    %2204 = vmatpush1.msra.mxu0 0.0
    %2205 = vmatprep.subr.mxu0 0.0
    %2206 = vmatpush1.msra.mxu0 0.0
    %2207 = vmatprep.subr.mxu0 0.0
    %2208 = vmatpush1.msra.mxu0 0.0
    %2209 = vmatprep.subr.mxu0 0.0
    %2210 = vmatpush1.msra.mxu0 0.0
    %2211 = vmatprep.subr.mxu0 0.0
    %2212 = vmatpush1.msra.mxu0 0.0
    %2213 = vmatprep.subr.mxu0 0.0
    %2214 = vmatpush1.msra.mxu0 0.0
    %2215 = vmatprep.subr.mxu0 0.0
    %2216 = vmatpush1.msra.mxu0 0.0
    %2217 = vmatprep.subr.mxu0 0.0
    %2218 = vmatpush1.msra.mxu0 0.0
    %2219 = vmatprep.subr.mxu0 0.0
    %2220 = vmatpush1.msra.mxu0 0.0
    %2221 = vmatprep.subr.mxu0 0.0
    %2222 = vmatpush1.msra.mxu0 0.0
    %2223 = vmatprep.subr.mxu0 0.0
    %2224 = vmatpush1.msra.mxu0 0.0
    %2225 = vmatprep.subr.mxu0 0.0
    %2226 = vmatpush1.msra.mxu0 0.0
    %2227 = vmatprep.mubr.f32.mxu0 0.0
    %2228 = vmatmul.mubr.f32.gmra.mrb[0].mxu0 %v2158
    %v2229 = vpop.f32.mrb[0].mxu0
    %v2230 = vadd.f32 %v2156, %v2229
    %v2231 = vpop.f32.mrb[0].mxu0
    %2232 = vmatprep.mubr.f32.mxu0 0.0
    %2233 = vmatmul.mubr.f32.gmra.mrb[0].mxu0 %v2161
    %v2234 = vpop.f32.mrb[0].mxu0
    %v2235 = vadd.f32 %v2156, %v2234
    %v2236 = vpop.f32.mrb[0].mxu0
    %2237 = vdwg.mxu0
    %v2238 = vld [vmem:[%s1 + $0x2e8] sm:$0xff]
    %v2239 = vld [vmem:[%s1 + $0x2f0] sm:$0xff]
    %v2240 = vld [vmem:[%s1 + $0x2f8] sm:$0xff]
    %v2241 = vld [vmem:[%s1 + $0x300] sm:$0xff]
    %v2242 = vld [vmem:[%s1 + $0x308] sm:$0xff]
    %v2243 = vld [vmem:[%s1 + $0x310] sm:$0xff]
    %v2244 = vld [vmem:[%s1 + $0x318] sm:$0xff]
    %v2245 = vld [vmem:[%s1 + $0x320] sm:$0xff]
    %v2248 = vsel %vm412, %v1937, %v1930
    %v2249 = vsel %vm213, %v2248, 0
    %2251 = vmatprep.subr.mxu0 0.0
    %2252 = vmatpush1.msra.mxu0 %v2242
    %2253 = vmatprep.subr.mxu0 0.0
    %2254 = vmatpush1.msra.mxu0 %v2243
    %2255 = vmatprep.subr.mxu0 0.0
    %2256 = vmatpush1.msra.mxu0 %v2244
    %2257 = vmatprep.subr.mxu0 0.0
    %2258 = vmatpush1.msra.mxu0 %v2245
    %2259 = vmatprep.subr.mxu0 0.0
    %2260 = vmatpush1.msra.mxu0 0.0
    %2261 = vmatprep.subr.mxu0 0.0
    %2262 = vmatpush1.msra.mxu0 0.0
    %2263 = vmatprep.subr.mxu0 0.0
    %2264 = vmatpush1.msra.mxu0 0.0
    %2265 = vmatprep.subr.mxu0 0.0
    %2266 = vmatpush1.msra.mxu0 0.0
    %2267 = vmatprep.subr.mxu0 0.0
    %2268 = vmatpush1.msra.mxu0 0.0
    %2269 = vmatprep.subr.mxu0 0.0
    %2270 = vmatpush1.msra.mxu0 0.0
    %2271 = vmatprep.subr.mxu0 0.0
    %2272 = vmatpush1.msra.mxu0 0.0
    %2273 = vmatprep.subr.mxu0 0.0
    %2274 = vmatpush1.msra.mxu0 0.0
    %2275 = vmatprep.subr.mxu0 0.0
    %2276 = vmatpush1.msra.mxu0 0.0
    %2277 = vmatprep.subr.mxu0 0.0
    %2278 = vmatpush1.msra.mxu0 0.0
    %2279 = vmatprep.subr.mxu0 0.0
    %2280 = vmatpush1.msra.mxu0 0.0
    %2281 = vmatprep.subr.mxu0 0.0
    %2282 = vmatpush1.msra.mxu0 0.0
    %2283 = vmatprep.subr.mxu0 0.0
    %2284 = vmatpush1.msra.mxu0 0.0
    %2285 = vmatprep.subr.mxu0 0.0
    %2286 = vmatpush1.msra.mxu0 0.0
    %2287 = vmatprep.subr.mxu0 0.0
    %2288 = vmatpush1.msra.mxu0 0.0
    %2289 = vmatprep.subr.mxu0 0.0
    %2290 = vmatpush1.msra.mxu0 0.0
    %2291 = vmatprep.subr.mxu0 0.0
    %2292 = vmatpush1.msra.mxu0 0.0
    %2293 = vmatprep.subr.mxu0 0.0
    %2294 = vmatpush1.msra.mxu0 0.0
    %2295 = vmatprep.subr.mxu0 0.0
    %2296 = vmatpush1.msra.mxu0 0.0
    %2297 = vmatprep.subr.mxu0 0.0
    %2298 = vmatpush1.msra.mxu0 0.0
    %2299 = vmatprep.subr.mxu0 0.0
    %2300 = vmatpush1.msra.mxu0 0.0
    %2301 = vmatprep.subr.mxu0 0.0
    %2302 = vmatpush1.msra.mxu0 0.0
    %2303 = vmatprep.subr.mxu0 0.0
    %2304 = vmatpush1.msra.mxu0 0.0
    %2305 = vmatprep.subr.mxu0 0.0
    %2306 = vmatpush1.msra.mxu0 0.0
    %2307 = vmatprep.subr.mxu0 0.0
    %2308 = vmatpush1.msra.mxu0 0.0
    %2309 = vmatprep.subr.mxu0 0.0
    %2310 = vmatpush1.msra.mxu0 0.0
    %2311 = vmatprep.subr.mxu0 0.0
    %2312 = vmatpush1.msra.mxu0 0.0
    %2313 = vmatprep.subr.mxu0 0.0
    %2314 = vmatpush1.msra.mxu0 0.0
    %2315 = vmatprep.mubr.f32.mxu0 0.0
    %2316 = vmatmul.mubr.f32.gmra.mrb[0].mxu0 %v2249
    %v2317 = vpop.f32.mrb[0].mxu0
    %v2318 = vadd.f32 0.0, %v2317
    %v2319 = vpop.f32.mrb[0].mxu0
    %2320 = vdwg.mxu0
    %v2323 = vunpack.c.l.s4 1966171168
    %v2324 = vunpack.c.0.s8 %v2323
    %v2325 = vlaneseq
    %v2326 = vshrl.u32 %v2325, 7
    %v2327 = vsub.s32 %v2324, %v2326
    %v2328 = vrot.slane %v2318, %v2327
    %v2329 = vcombine.high %v2328, %v2328
    %v2331 = vunpack.c.l.s4 1966171168
    %v2332 = vunpack.c.0.s8 %v2331
    %v2333 = vlaneseq
    %v2334 = vshrl.u32 %v2333, 7
    %v2335 = vsub.s32 %v2332, %v2334
    %v2336 = vrot.slane %v2328, %v2335
    %v2338 = vunpack.c.l.s4 1966171168
    %v2339 = vunpack.c.0.s8 %v2338
    %v2340 = vlaneseq
    %v2341 = vshrl.u32 %v2340, 7
    %v2342 = vsub.s32 %v2339, %v2341
    %v2343 = vrot.slane %v2329, %v2342
    %v2344 = vlaneseq
    %v2345 = vshrl.u32 %v2344, 7
    %v2346 = vsub.s32 0, %v2345
    %v2347 = vrot.slane %v2336, %v2346
    %v2348 = vlaneseq
    %v2349 = vshrl.u32 %v2348, 7
    %v2350 = vsub.s32 0, %v2349
    %v2351 = vrot.slane %v2343, %v2350
    %v2355 = vsel %vm213, %v1922, 0
    %v2358 = vsel %vm213, %v1923, 0
    %2360 = vmatprep.subr.mxu0 0.0
    %2361 = vmatpush1.msra.mxu0 %v2238
    %2362 = vmatprep.subr.mxu0 0.0
    %2363 = vmatpush1.msra.mxu0 %v2239
    %2364 = vmatprep.subr.mxu0 0.0
    %2365 = vmatpush1.msra.mxu0 %v2240
    %2366 = vmatprep.subr.mxu0 0.0
    %2367 = vmatpush1.msra.mxu0 %v2241
    %2368 = vmatprep.subr.mxu0 0.0
    %2369 = vmatpush1.msra.mxu0 0.0
    %2370 = vmatprep.subr.mxu0 0.0
    %2371 = vmatpush1.msra.mxu0 0.0
    %2372 = vmatprep.subr.mxu0 0.0
    %2373 = vmatpush1.msra.mxu0 0.0
    %2374 = vmatprep.subr.mxu0 0.0
    %2375 = vmatpush1.msra.mxu0 0.0
    %2376 = vmatprep.subr.mxu0 0.0
    %2377 = vmatpush1.msra.mxu0 0.0
    %2378 = vmatprep.subr.mxu0 0.0
    %2379 = vmatpush1.msra.mxu0 0.0
    %2380 = vmatprep.subr.mxu0 0.0
    %2381 = vmatpush1.msra.mxu0 0.0
    %2382 = vmatprep.subr.mxu0 0.0
    %2383 = vmatpush1.msra.mxu0 0.0
    %2384 = vmatprep.subr.mxu0 0.0
    %2385 = vmatpush1.msra.mxu0 0.0
    %2386 = vmatprep.subr.mxu0 0.0
    %2387 = vmatpush1.msra.mxu0 0.0
    %2388 = vmatprep.subr.mxu0 0.0
    %2389 = vmatpush1.msra.mxu0 0.0
    %2390 = vmatprep.subr.mxu0 0.0
    %2391 = vmatpush1.msra.mxu0 0.0
    %2392 = vmatprep.subr.mxu0 0.0
    %2393 = vmatpush1.msra.mxu0 0.0
    %2394 = vmatprep.subr.mxu0 0.0
    %2395 = vmatpush1.msra.mxu0 0.0
    %2396 = vmatprep.subr.mxu0 0.0
    %2397 = vmatpush1.msra.mxu0 0.0
    %2398 = vmatprep.subr.mxu0 0.0
    %2399 = vmatpush1.msra.mxu0 0.0
    %2400 = vmatprep.subr.mxu0 0.0
    %2401 = vmatpush1.msra.mxu0 0.0
    %2402 = vmatprep.subr.mxu0 0.0
    %2403 = vmatpush1.msra.mxu0 0.0
    %2404 = vmatprep.subr.mxu0 0.0
    %2405 = vmatpush1.msra.mxu0 0.0
    %2406 = vmatprep.subr.mxu0 0.0
    %2407 = vmatpush1.msra.mxu0 0.0
    %2408 = vmatprep.subr.mxu0 0.0
    %2409 = vmatpush1.msra.mxu0 0.0
    %2410 = vmatprep.subr.mxu0 0.0
    %2411 = vmatpush1.msra.mxu0 0.0
    %2412 = vmatprep.subr.mxu0 0.0
    %2413 = vmatpush1.msra.mxu0 0.0
    %2414 = vmatprep.subr.mxu0 0.0
    %2415 = vmatpush1.msra.mxu0 0.0
    %2416 = vmatprep.subr.mxu0 0.0
    %2417 = vmatpush1.msra.mxu0 0.0
    %2418 = vmatprep.subr.mxu0 0.0
    %2419 = vmatpush1.msra.mxu0 0.0
    %2420 = vmatprep.subr.mxu0 0.0
    %2421 = vmatpush1.msra.mxu0 0.0
    %2422 = vmatprep.subr.mxu0 0.0
    %2423 = vmatpush1.msra.mxu0 0.0
    %2424 = vmatprep.mubr.f32.mxu0 0.0
    %2425 = vmatmul.mubr.f32.gmra.mrb[0].mxu0 %v2355
    %v2426 = vpop.f32.mrb[0].mxu0
    %v2427 = vadd.f32 %v2347, %v2426
    %v2428 = vpop.f32.mrb[0].mxu0
    %2429 = vmatprep.mubr.f32.mxu0 0.0
    %2430 = vmatmul.mubr.f32.gmra.mrb[0].mxu0 %v2358
    %v2431 = vpop.f32.mrb[0].mxu0
    %v2432 = vadd.f32 %v2351, %v2431
    %v2433 = vpop.f32.mrb[0].mxu0
    %2434 = vdwg.mxu0
    %v2435 = vadd.f32 %v2427, %v2230
    %v2436 = vadd.f32 %v2432, %v2235
    %v2437 = vsel %vm213, %v2435, -inf
    %v2438 = vrot.slane %v2437, 4
    %v2439 = vmax.f32 %v2437, %v2438
    %v2440 = vrot.slane %v2439, 2
    %v2441 = vmax.f32 %v2439, %v2440
    %v2442 = vrot.slane %v2441, 1
    %v2443 = vmax.f32 %v2441, %v2442
    %v2444 = vsel %vm213, %v2436, -inf
    %v2445 = vrot.slane %v2444, 4
    %v2446 = vmax.f32 %v2444, %v2445
    %v2447 = vrot.slane %v2446, 2
    %v2448 = vmax.f32 %v2446, %v2447
    %v2449 = vrot.slane %v2448, 1
    %v2450 = vmax.f32 %v2448, %v2449
    %v2451 = vmax.f32 %v2443, 0.0
    %v2452 = vmax.f32 %v2450, 0.0
    %v2453 = vld [vmem:[%s1 + $0x328] sm:$0xff]
    %v2454 = vld [vmem:[%s1 + $0x330] sm:$0xff]
    %v2455 = vld [vmem:[%s1 + $0x338] sm:$0xff]
    %v2456 = vld [vmem:[%s1 + $0x340] sm:$0xff]
    %v2457 = vld [vmem:[%s2 + $0xb] sm:$0x1]
    %v2458 = vlaneseq
    %v2459 = vshrl.u32 %v2458, 7
    %v2460 = vsub.s32 0, %v2459
    %v2461 = vrot.slane %v2457, %v2460
    %v2464 = vsel %vm412, %v2452, %v2451
    %v2465 = vsel %vm213, %v2464, 0
    %2467 = vmatprep.subr.mxu0 0.0
    %2468 = vmatpush1.msra.mxu0 %v2453
    %2469 = vmatprep.subr.mxu0 0.0
    %2470 = vmatpush1.msra.mxu0 %v2454
    %2471 = vmatprep.subr.mxu0 0.0
    %2472 = vmatpush1.msra.mxu0 %v2455
    %2473 = vmatprep.subr.mxu0 0.0
    %2474 = vmatpush1.msra.mxu0 %v2456
    %2475 = vmatprep.subr.mxu0 0.0
    %2476 = vmatpush1.msra.mxu0 0.0
    %2477 = vmatprep.subr.mxu0 0.0
    %2478 = vmatpush1.msra.mxu0 0.0
    %2479 = vmatprep.subr.mxu0 0.0
    %2480 = vmatpush1.msra.mxu0 0.0
    %2481 = vmatprep.subr.mxu0 0.0
    %2482 = vmatpush1.msra.mxu0 0.0
    %2483 = vmatprep.subr.mxu0 0.0
    %2484 = vmatpush1.msra.mxu0 0.0
    %2485 = vmatprep.subr.mxu0 0.0
    %2486 = vmatpush1.msra.mxu0 0.0
    %2487 = vmatprep.subr.mxu0 0.0
    %2488 = vmatpush1.msra.mxu0 0.0
    %2489 = vmatprep.subr.mxu0 0.0
    %2490 = vmatpush1.msra.mxu0 0.0
    %2491 = vmatprep.subr.mxu0 0.0
    %2492 = vmatpush1.msra.mxu0 0.0
    %2493 = vmatprep.subr.mxu0 0.0
    %2494 = vmatpush1.msra.mxu0 0.0
    %2495 = vmatprep.subr.mxu0 0.0
    %2496 = vmatpush1.msra.mxu0 0.0
    %2497 = vmatprep.subr.mxu0 0.0
    %2498 = vmatpush1.msra.mxu0 0.0
    %2499 = vmatprep.subr.mxu0 0.0
    %2500 = vmatpush1.msra.mxu0 0.0
    %2501 = vmatprep.subr.mxu0 0.0
    %2502 = vmatpush1.msra.mxu0 0.0
    %2503 = vmatprep.subr.mxu0 0.0
    %2504 = vmatpush1.msra.mxu0 0.0
    %2505 = vmatprep.subr.mxu0 0.0
    %2506 = vmatpush1.msra.mxu0 0.0
    %2507 = vmatprep.subr.mxu0 0.0
    %2508 = vmatpush1.msra.mxu0 0.0
    %2509 = vmatprep.subr.mxu0 0.0
    %2510 = vmatpush1.msra.mxu0 0.0
    %2511 = vmatprep.subr.mxu0 0.0
    %2512 = vmatpush1.msra.mxu0 0.0
    %2513 = vmatprep.subr.mxu0 0.0
    %2514 = vmatpush1.msra.mxu0 0.0
    %2515 = vmatprep.subr.mxu0 0.0
    %2516 = vmatpush1.msra.mxu0 0.0
    %2517 = vmatprep.subr.mxu0 0.0
    %2518 = vmatpush1.msra.mxu0 0.0
    %2519 = vmatprep.subr.mxu0 0.0
    %2520 = vmatpush1.msra.mxu0 0.0
    %2521 = vmatprep.subr.mxu0 0.0
    %2522 = vmatpush1.msra.mxu0 0.0
    %2523 = vmatprep.subr.mxu0 0.0
    %2524 = vmatpush1.msra.mxu0 0.0
    %2525 = vmatprep.subr.mxu0 0.0
    %2526 = vmatpush1.msra.mxu0 0.0
    %2527 = vmatprep.subr.mxu0 0.0
    %2528 = vmatpush1.msra.mxu0 0.0
    %2529 = vmatprep.subr.mxu0 0.0
    %2530 = vmatpush1.msra.mxu0 0.0
    %2531 = vmatprep.mubr.f32.mxu0 0.0
    %2532 = vmatmul.mubr.f32.gmra.mrb[0].mxu0 %v2465
    %v2533 = vpop.f32.mrb[0].mxu0
    %v2534 = vadd.f32 %v2461, %v2533
    %v2535 = vpop.f32.mrb[0].mxu0
    %2536 = vdwg.mxu0
    %vm2537 = vcmask 123904
    %2538 = vst.msk [vmem:[#allocation2] sm:$0x3] %vm2537, %v2534
    // Predicated region
    $region14: #{tpu_custom_call.1} parent=1 // pred_check
      _
    $region15: #{tpu_custom_call.1} parent=1 // pred_check_branch
      %2540 = sbr.rel (0) target = $region17
    $region16: #{tpu_custom_call.1} parent=1 // pred_region
      %s2542 = ssub.s32 32, 32
      %2543 = vsyncadd [#allocation3], %s2542
      %s2545 = sshll.u32 [#allocation2], 4
      %s2546 = int_to_ptr.vmem [resolvable:$true] %s2545
      %2548 = dma.vmem_to_hbm [thread:$0]  %s2546, 32, %s3, [#allocation3]
    $region17: #{tpu_custom_call.1} parent=1 // pred_fallthru
      _
    // Predicated region
    $region18: #{tpu_custom_call.1} parent=1 // pred_check
      _
    $region19: #{tpu_custom_call.1} parent=1 // pred_check_branch
      %2550 = sbr.rel (0) target = $region21
    $region20: #{tpu_custom_call.1} parent=1 // pred_region
      %2551 = dma.done [#allocation3], 32
    $region21: #{tpu_custom_call.1} parent=1 // pred_fallthru
      _
    %2552 = vsyncpa [#allocation3], 1

</llo_original>
